<compile_context>
chip_gen: v6e
topology: v6e:2x2x1
jax: 0.10.0
libtpu: 0.0.40
codegen_flags: <defaults>
</compile_context>

<pallas_src>
import jax
import jax.numpy as jnp
import numpy as np
from jax.experimental import pallas as pl
from jax.experimental.pallas import tpu as pltpu


def _align8(n):
    return (n + 7) & ~7


def slab_offsets(E, H, C):
    """Static row offsets of each parameter inside the packed (rows, 8H) slab."""
    o = {}
    o["wih"] = 0                              # (E, 8H)  permuted input projection
    o["b"] = _align8(o["wih"] + E)            # (1, 8H)  permuted b_ih + b_hh
    o["wblk"] = _align8(o["b"] + 1)           # (2H, 8H) block-diag recurrent weight
    o["w1"] = _align8(o["wblk"] + 2 * H)      # (2H, H)  fc1 weight (cols 0:H)
    o["b1"] = _align8(o["w1"] + 2 * H)        # (1, H)
    o["w2"] = _align8(o["b1"] + 1)            # (H, C)   fc2 weight (cols 0:C)
    o["b2"] = _align8(o["w2"] + H)            # (1, C)
    o["rows"] = _align8(o["b2"] + 1)
    return o


# ---------------------------------------------------------------------------
# Fused EasyLSTM forward: one pallas_call, no grid, everything VMEM-resident.
# ---------------------------------------------------------------------------
def easy_lstm_forward(x_bte, slab, hidden_size, num_classes):
    """x_bte: (B, T, E) batch-first, like the PyTorch module."""
    B, T, E = x_bte.shape
    H, C = hidden_size, num_classes
    GG = 8 * H
    off = slab_offsets(E, H, C)

    # Time-major, flattened to 2-D so every in-kernel op is a plain 2-D tile op.
    x_2d = jnp.swapaxes(x_bte, 0, 1).reshape(T * B, E)

    def kernel(x_ref, slab_ref, out_ref):
        # --- One MXU pass: input projection (+ folded b_ih + b_hh) for all T
        #     timesteps and both directions, permuted gate order:
        #     (T*B, E) @ (E, 8H) -> (T*B, 8H).
        xp = (jnp.dot(x_ref[...], slab_ref[off["wih"]:off["wih"] + E, :],
                      preferred_element_type=jnp.float32)
              + slab_ref[off["b"]:off["b"] + 1, :])

        # Block-diagonal recurrent weight: rows 0:H act on h_fwd, rows H:2H on
        # h_bwd, columns already permuted to the per-gate layout.
        w_blk = slab_ref[off["wblk"]:off["wblk"] + 2 * H, :]          # (2H, 8H)

        # Lane mask: True on columns belonging to the forward direction
        # ((col mod 2H) < H under the per-gate [fwd | bwd] layout).
        col = jax.lax.broadcasted_iota(jnp.int32, (B, GG), 1)
        fwd_lane = (col % (2 * H)) < H

        h_cat = jnp.zeros((B, 2 * H), jnp.float32)    # [h_fwd | h_bwd]
        c_cat = jnp.zeros((B, 2 * H), jnp.float32)

        # Static unroll (T=8): one block-diag matmul + 3 EUP passes per step.
        # The pre-activation select only depends on xp, so it is not on the
        # serial h->h dependency chain.
        for t in range(T):
            rf, rb = t * B, (T - 1 - t) * B
            pre = jnp.where(fwd_lane, xp[rf:rf + B, :], xp[rb:rb + B, :])
            gates = pre + jnp.dot(h_cat, w_blk,
                                  preferred_element_type=jnp.float32)
            # Permuted gate layout: [ i | f | g | o ], each 2H lanes wide,
            # fwd in the low H lanes / bwd in the high H lanes of each block.
            if_sig = jax.nn.sigmoid(gates[:, 0:4 * H])
            g_gate = jnp.tanh(gates[:, 4 * H:6 * H])
            o_gate = jax.nn.sigmoid(gates[:, 6 * H:8 * H])
            i_gate = if_sig[:, 0:2 * H]
            f_gate = if_sig[:, 2 * H:4 * H]
            c_cat = f_gate * c_cat + i_gate * g_gate
            h_cat = o_gate * jnp.tanh(c_cat)

        # --- Head: h_cat == torch.cat(hidden[-2], hidden[-1]) -> ReLU -> fc1
        #     -> dropout (identity in eval) -> fc2.
        rel = jnp.maximum(h_cat, 0.0)
        d1 = (jnp.dot(rel, slab_ref[off["w1"]:off["w1"] + 2 * H, 0:H],
                      preferred_element_type=jnp.float32)
              + slab_ref[off["b1"]:off["b1"] + 1, 0:H])
        # TODO(synk): nn.Dropout is a no-op here (inference / eval semantics).
        out_ref[...] = (jnp.dot(d1, slab_ref[off["w2"]:off["w2"] + H, 0:C],
                                preferred_element_type=jnp.float32)
                        + slab_ref[off["b2"]:off["b2"] + 1, 0:C]
                        ).astype(out_ref.dtype)

    vmem = pl.BlockSpec(memory_space=pltpu.MemorySpace.VMEM)
    return pl.pallas_call(
        kernel,
        out_shape=jax.ShapeDtypeStruct((B, C), jnp.float32),
        in_specs=[vmem, vmem],
        out_specs=vmem,
    )(x_2d, slab)


# ---------------------------------------------------------------------------
# Parameter init (PyTorch-style) + host-side packing into one slab.
# ---------------------------------------------------------------------------
def init_params(key, embedding_dim, hidden_size, num_classes):
    E, H, C = embedding_dim, hidden_size, num_classes
    keys = jax.random.split(key, 12)

    def u(k, shape, bound):
        return jax.random.uniform(k, shape, jnp.float32, -bound, bound)

    k_lstm = 1.0 / np.sqrt(H)
    k1 = 1.0 / np.sqrt(2 * H)
    k2 = 1.0 / np.sqrt(H)
    # LSTM per direction: W_ih (4H,E), W_hh (4H,H), b_ih + b_hh folded into one.
    return {
        "wih_fwd": u(keys[0], (4 * H, E), k_lstm),
        "whh_fwd": u(keys[1], (4 * H, H), k_lstm),
        "b_fwd": u(keys[2], (4 * H,), k_lstm) + u(keys[3], (4 * H,), k_lstm),
        "wih_bwd": u(keys[4], (4 * H, E), k_lstm),
        "whh_bwd": u(keys[5], (4 * H, H), k_lstm),
        "b_bwd": u(keys[6], (4 * H,), k_lstm) + u(keys[7], (4 * H,), k_lstm),
        "w1": u(keys[8], (H, 2 * H), k1),
        "b1": u(keys[9], (H,), k1),
        "w2": u(keys[10], (C, H), k2),
        "b2": u(keys[11], (C,), k2),
    }


def pack_params(raw, embedding_dim, hidden_size, num_classes):
    """Pack everything into ONE (rows, 8H) f32 slab with 8-row-aligned offsets."""
    E, H, C = embedding_dim, hidden_size, num_classes
    G, GG = 4 * H, 8 * H
    off = slab_offsets(E, H, C)

    # Gate-column permutation: fwd-then-bwd [i f g o | i f g o] ->
    # per-gate [i_f i_b | f_f f_b | g_f g_b | o_f o_b].
    perm = np.concatenate([np.arange(d * G + k * H, d * G + (k + 1) * H)
                           for k in range(4) for d in range(2)])

    wih_both = np.concatenate([np.asarray(raw["wih_fwd"]).T,
                               np.asarray(raw["wih_bwd"]).T], axis=1)   # (E, 8H)
    b_both = np.concatenate([np.asarray(raw["b_fwd"]),
                             np.asarray(raw["b_bwd"])])                 # (8H,)
    w_blk0 = np.zeros((2 * H, GG), np.float32)                          # block-diag
    w_blk0[0:H, 0:G] = np.asarray(raw["whh_fwd"]).T
    w_blk0[H:2 * H, G:GG] = np.asarray(raw["whh_bwd"]).T

    slab = np.zeros((off["rows"], GG), np.float32)
    slab[off["wih"]:off["wih"] + E, :] = wih_both[:, perm]
    slab[off["b"], :] = b_both[perm]
    slab[off["wblk"]:off["wblk"] + 2 * H, :] = w_blk0[:, perm]
    slab[off["w1"]:off["w1"] + 2 * H, 0:H] = np.asarray(raw["w1"]).T
    slab[off["b1"], 0:H] = np.asarray(raw["b1"])
    slab[off["w2"]:off["w2"] + H, 0:C] = np.asarray(raw["w2"]).T
    slab[off["b2"], 0:C] = np.asarray(raw["b2"])
    return jnp.asarray(slab)


# ---------------------------------------------------------------------------
# Pure-JAX reference (lax.scan) for a correctness sanity check.
# ---------------------------------------------------------------------------
def _ref_lstm_dir(x_tbe, w_ih, w_hh, bias_row):
    H = w_hh.shape[1]
    B = x_tbe.shape[1]
    w_ih_t, w_hh_t = w_ih.T, w_hh.T

    def step(carry, x_t):
        h, c = carry
        gates = x_t @ w_ih_t + h @ w_hh_t + bias_row
        i = jax.nn.sigmoid(gates[:, 0:H])
        f = jax.nn.sigmoid(gates[:, H:2 * H])
        g = jnp.tanh(gates[:, 2 * H:3 * H])
        o = jax.nn.sigmoid(gates[:, 3 * H:4 * H])
        c = f * c + i * g
        h = o * jnp.tanh(c)
        return (h, c), None

    (h, _), _ = jax.lax.scan(step,
                             (jnp.zeros((B, H), jnp.float32),
                              jnp.zeros((B, H), jnp.float32)),
                             x_tbe)
    return h


def easy_lstm_reference(x_bte, raw):
    x_tbe = jnp.transpose(x_bte, (1, 0, 2))
    h_fwd = _ref_lstm_dir(x_tbe, raw["wih_fwd"], raw["whh_fwd"],
                          raw["b_fwd"][None, :])
    h_bwd = _ref_lstm_dir(x_tbe[::-1], raw["wih_bwd"], raw["whh_bwd"],
                          raw["b_bwd"][None, :])
    cat = jnp.concatenate([h_fwd, h_bwd], axis=1)
    rel = jnp.maximum(cat, 0.0)
    d1 = rel @ raw["w1"].T + raw["b1"]
    return d1 @ raw["w2"].T + raw["b2"]


if __name__ == "__main__":
    # Shapes consistent with the module: batch=2, seq=8, embedding=16,
    # hidden=32, num_classes=4, lstm_layers=1 (bidirectional).
    B, T, E, H, C = 2, 8, 16, 32, 4

    key = jax.random.PRNGKey(0)
    kx, kp = jax.random.split(key)
    x = jax.random.normal(kx, (B, T, E), jnp.float32)
    raw = init_params(kp, E, H, C)
    slab = pack_params(raw, E, H, C)

    preds = jax.block_until_ready(easy_lstm_forward(x, slab, H, C))
    assert preds.shape == (B, C), preds.shape

    ref = jax.block_until_ready(easy_lstm_reference(x, raw))
    np.testing.assert_allclose(np.asarray(preds), np.asarray(ref),
                               rtol=1e-2, atol=1e-2)

    print("KERNEL_OK")
</pallas_src>

<mosaic_0001>
module attributes {stable_mosaic.version = 11 : i64} {
  func.func @kernel(%arg0: memref<16x16xf32, #tpu.memory_space<vmem>>, %arg1: memref<200x256xf32, #tpu.memory_space<vmem>>, %arg2: memref<2x4xf32, #tpu.memory_space<vmem>>) attributes {dimension_semantics = [], scalar_prefetch = 0 : i64, scratch_operands = 0 : i64, tpu.core_type = #tpu.core_type<tc>} {
    %c0 = arith.constant 0 : index
    %c0_0 = arith.constant 0 : index
    %0 = vector.load %arg0[%c0, %c0_0] : memref<16x16xf32, #tpu.memory_space<vmem>>, vector<16x16xf32>
    %c0_1 = arith.constant 0 : index
    %c0_2 = arith.constant 0 : index
    %1 = vector.load %arg1[%c0_1, %c0_2] : memref<200x256xf32, #tpu.memory_space<vmem>>, vector<16x256xf32>
    %cst = arith.constant dense<0.000000e+00> : vector<16x256xf32>
    %2 = tpu.matmul %0, %1, %cst {dimension_numbers = #tpu.dot_dimension_numbers<[1], [0], [0], [1], [0, 0, 1, 1], [], []>} : vector<16x16xf32>, vector<16x256xf32>, vector<16x256xf32> -> vector<16x256xf32>
    %c16 = arith.constant 16 : index
    %c0_3 = arith.constant 0 : index
    %3 = vector.load %arg1[%c16, %c0_3] : memref<200x256xf32, #tpu.memory_space<vmem>>, vector<1x256xf32>
    %4 = vector.broadcast %3 : vector<1x256xf32> to vector<16x256xf32>
    %5 = arith.addf %2, %4 : vector<16x256xf32>
    %c24 = arith.constant 24 : index
    %c0_4 = arith.constant 0 : index
    %6 = vector.load %arg1[%c24, %c0_4] : memref<200x256xf32, #tpu.memory_space<vmem>>, vector<64x256xf32>
    %7 = tpu.iota {dimensions = array<i32: 1>} : vector<2x256xi32>
    %c64_i32 = arith.constant 64 : i32
    %c0_i32 = arith.constant 0 : i32
    %8 = arith.cmpi eq, %c64_i32, %c0_i32 : i32
    %c1_i32 = arith.constant 1 : i32
    %9 = arith.select %8, %c1_i32, %c64_i32 : i32
    %10 = vector.broadcast %9 : i32 to vector<2x256xi32>
    %11 = arith.remsi %7, %10 : vector<2x256xi32>
    %c0_i32_5 = arith.constant 0 : i32
    %12 = vector.broadcast %c0_i32_5 : i32 to vector<2x256xi32>
    %13 = arith.cmpi ne, %11, %12 : vector<2x256xi32>
    %c0_i32_6 = arith.constant 0 : i32
    %14 = vector.broadcast %c0_i32_6 : i32 to vector<2x256xi32>
    %15 = arith.cmpi slt, %11, %14 : vector<2x256xi32>
    %c0_i32_7 = arith.constant 0 : i32
    %16 = arith.cmpi slt, %9, %c0_i32_7 : i32
    %17 = vector.broadcast %16 : i1 to vector<2x256xi1>
    %18 = vector.broadcast %17 : vector<2x256xi1> to vector<2x256xi1>
    %19 = arith.xori %15, %18 : vector<2x256xi1>
    %20 = arith.andi %19, %13 : vector<2x256xi1>
    %21 = vector.broadcast %9 : i32 to vector<2x256xi32>
    %22 = arith.addi %11, %21 : vector<2x256xi32>
    %23 = arith.select %20, %22, %11 : vector<2x256xi1>, vector<2x256xi32>
    %c32_i32 = arith.constant 32 : i32
    %24 = vector.broadcast %c32_i32 : i32 to vector<2x256xi32>
    %25 = arith.cmpi slt, %23, %24 : vector<2x256xi32>
    %cst_8 = arith.constant 0.000000e+00 : f32
    %26 = vector.broadcast %cst_8 : f32 to vector<2x64xf32>
    %cst_9 = arith.constant 0.000000e+00 : f32
    %27 = vector.broadcast %cst_9 : f32 to vector<2x64xf32>
    %28 = vector.extract_strided_slice %5 {offsets = [0, 0], sizes = [2, 256], strides = [1, 1]} : vector<16x256xf32> to vector<2x256xf32>
    %29 = vector.extract_strided_slice %5 {offsets = [14, 0], sizes = [2, 256], strides = [1, 1]} : vector<16x256xf32> to vector<2x256xf32>
    %30 = arith.select %25, %28, %29 : vector<2x256xi1>, vector<2x256xf32>
    %cst_10 = arith.constant dense<0.000000e+00> : vector<2x256xf32>
    %31 = tpu.matmul %26, %6, %cst_10 {dimension_numbers = #tpu.dot_dimension_numbers<[1], [0], [0], [1], [0, 0, 1, 1], [], []>} : vector<2x64xf32>, vector<64x256xf32>, vector<2x256xf32> -> vector<2x256xf32>
    %32 = arith.addf %30, %31 : vector<2x256xf32>
    %33 = vector.extract_strided_slice %32 {offsets = [0, 0], sizes = [2, 128], strides = [1, 1]} : vector<2x256xf32> to vector<2x128xf32>
    %34 = arith.negf %33 : vector<2x128xf32>
    %35 = math.exp %34 : vector<2x128xf32>
    %cst_11 = arith.constant 1.000000e+00 : f32
    %36 = vector.broadcast %cst_11 : f32 to vector<2x128xf32>
    %37 = arith.addf %36, %35 : vector<2x128xf32>
    %38 = arith.divf %36, %37 : vector<2x128xf32>
    %39 = vector.extract_strided_slice %32 {offsets = [0, 128], sizes = [2, 64], strides = [1, 1]} : vector<2x256xf32> to vector<2x64xf32>
    %40 = math.tanh %39 : vector<2x64xf32>
    %41 = vector.extract_strided_slice %32 {offsets = [0, 192], sizes = [2, 64], strides = [1, 1]} : vector<2x256xf32> to vector<2x64xf32>
    %42 = arith.negf %41 : vector<2x64xf32>
    %43 = math.exp %42 : vector<2x64xf32>
    %cst_12 = arith.constant 1.000000e+00 : f32
    %44 = vector.broadcast %cst_12 : f32 to vector<2x64xf32>
    %45 = arith.addf %44, %43 : vector<2x64xf32>
    %46 = arith.divf %44, %45 : vector<2x64xf32>
    %47 = vector.extract_strided_slice %38 {offsets = [0, 0], sizes = [2, 64], strides = [1, 1]} : vector<2x128xf32> to vector<2x64xf32>
    %48 = vector.extract_strided_slice %38 {offsets = [0, 64], sizes = [2, 64], strides = [1, 1]} : vector<2x128xf32> to vector<2x64xf32>
    %49 = arith.mulf %48, %27 : vector<2x64xf32>
    %50 = arith.mulf %47, %40 : vector<2x64xf32>
    %51 = arith.addf %49, %50 : vector<2x64xf32>
    %52 = math.tanh %51 : vector<2x64xf32>
    %53 = arith.mulf %46, %52 : vector<2x64xf32>
    %54 = vector.extract_strided_slice %5 {offsets = [2, 0], sizes = [2, 256], strides = [1, 1]} : vector<16x256xf32> to vector<2x256xf32>
    %55 = vector.extract_strided_slice %5 {offsets = [12, 0], sizes = [2, 256], strides = [1, 1]} : vector<16x256xf32> to vector<2x256xf32>
    %56 = arith.select %25, %54, %55 : vector<2x256xi1>, vector<2x256xf32>
    %cst_13 = arith.constant dense<0.000000e+00> : vector<2x256xf32>
    %57 = tpu.matmul %53, %6, %cst_13 {dimension_numbers = #tpu.dot_dimension_numbers<[1], [0], [0], [1], [0, 0, 1, 1], [], []>} : vector<2x64xf32>, vector<64x256xf32>, vector<2x256xf32> -> vector<2x256xf32>
    %58 = arith.addf %56, %57 : vector<2x256xf32>
    %59 = vector.extract_strided_slice %58 {offsets = [0, 0], sizes = [2, 128], strides = [1, 1]} : vector<2x256xf32> to vector<2x128xf32>
    %60 = arith.negf %59 : vector<2x128xf32>
    %61 = math.exp %60 : vector<2x128xf32>
    %cst_14 = arith.constant 1.000000e+00 : f32
    %62 = vector.broadcast %cst_14 : f32 to vector<2x128xf32>
    %63 = arith.addf %62, %61 : vector<2x128xf32>
    %64 = arith.divf %62, %63 : vector<2x128xf32>
    %65 = vector.extract_strided_slice %58 {offsets = [0, 128], sizes = [2, 64], strides = [1, 1]} : vector<2x256xf32> to vector<2x64xf32>
    %66 = math.tanh %65 : vector<2x64xf32>
    %67 = vector.extract_strided_slice %58 {offsets = [0, 192], sizes = [2, 64], strides = [1, 1]} : vector<2x256xf32> to vector<2x64xf32>
    %68 = arith.negf %67 : vector<2x64xf32>
    %69 = math.exp %68 : vector<2x64xf32>
    %cst_15 = arith.constant 1.000000e+00 : f32
    %70 = vector.broadcast %cst_15 : f32 to vector<2x64xf32>
    %71 = arith.addf %70, %69 : vector<2x64xf32>
    %72 = arith.divf %70, %71 : vector<2x64xf32>
    %73 = vector.extract_strided_slice %64 {offsets = [0, 0], sizes = [2, 64], strides = [1, 1]} : vector<2x128xf32> to vector<2x64xf32>
    %74 = vector.extract_strided_slice %64 {offsets = [0, 64], sizes = [2, 64], strides = [1, 1]} : vector<2x128xf32> to vector<2x64xf32>
    %75 = arith.mulf %74, %51 : vector<2x64xf32>
    %76 = arith.mulf %73, %66 : vector<2x64xf32>
    %77 = arith.addf %75, %76 : vector<2x64xf32>
    %78 = math.tanh %77 : vector<2x64xf32>
    %79 = arith.mulf %72, %78 : vector<2x64xf32>
    %80 = vector.extract_strided_slice %5 {offsets = [4, 0], sizes = [2, 256], strides = [1, 1]} : vector<16x256xf32> to vector<2x256xf32>
    %81 = vector.extract_strided_slice %5 {offsets = [10, 0], sizes = [2, 256], strides = [1, 1]} : vector<16x256xf32> to vector<2x256xf32>
    %82 = arith.select %25, %80, %81 : vector<2x256xi1>, vector<2x256xf32>
    %cst_16 = arith.constant dense<0.000000e+00> : vector<2x256xf32>
    %83 = tpu.matmul %79, %6, %cst_16 {dimension_numbers = #tpu.dot_dimension_numbers<[1], [0], [0], [1], [0, 0, 1, 1], [], []>} : vector<2x64xf32>, vector<64x256xf32>, vector<2x256xf32> -> vector<2x256xf32>
    %84 = arith.addf %82, %83 : vector<2x256xf32>
    %85 = vector.extract_strided_slice %84 {offsets = [0, 0], sizes = [2, 128], strides = [1, 1]} : vector<2x256xf32> to vector<2x128xf32>
    %86 = arith.negf %85 : vector<2x128xf32>
    %87 = math.exp %86 : vector<2x128xf32>
    %cst_17 = arith.constant 1.000000e+00 : f32
    %88 = vector.broadcast %cst_17 : f32 to vector<2x128xf32>
    %89 = arith.addf %88, %87 : vector<2x128xf32>
    %90 = arith.divf %88, %89 : vector<2x128xf32>
    %91 = vector.extract_strided_slice %84 {offsets = [0, 128], sizes = [2, 64], strides = [1, 1]} : vector<2x256xf32> to vector<2x64xf32>
    %92 = math.tanh %91 : vector<2x64xf32>
    %93 = vector.extract_strided_slice %84 {offsets = [0, 192], sizes = [2, 64], strides = [1, 1]} : vector<2x256xf32> to vector<2x64xf32>
    %94 = arith.negf %93 : vector<2x64xf32>
    %95 = math.exp %94 : vector<2x64xf32>
    %cst_18 = arith.constant 1.000000e+00 : f32
    %96 = vector.broadcast %cst_18 : f32 to vector<2x64xf32>
    %97 = arith.addf %96, %95 : vector<2x64xf32>
    %98 = arith.divf %96, %97 : vector<2x64xf32>
    %99 = vector.extract_strided_slice %90 {offsets = [0, 0], sizes = [2, 64], strides = [1, 1]} : vector<2x128xf32> to vector<2x64xf32>
    %100 = vector.extract_strided_slice %90 {offsets = [0, 64], sizes = [2, 64], strides = [1, 1]} : vector<2x128xf32> to vector<2x64xf32>
    %101 = arith.mulf %100, %77 : vector<2x64xf32>
    %102 = arith.mulf %99, %92 : vector<2x64xf32>
    %103 = arith.addf %101, %102 : vector<2x64xf32>
    %104 = math.tanh %103 : vector<2x64xf32>
    %105 = arith.mulf %98, %104 : vector<2x64xf32>
    %106 = vector.extract_strided_slice %5 {offsets = [6, 0], sizes = [2, 256], strides = [1, 1]} : vector<16x256xf32> to vector<2x256xf32>
    %107 = vector.extract_strided_slice %5 {offsets = [8, 0], sizes = [2, 256], strides = [1, 1]} : vector<16x256xf32> to vector<2x256xf32>
    %108 = arith.select %25, %106, %107 : vector<2x256xi1>, vector<2x256xf32>
    %cst_19 = arith.constant dense<0.000000e+00> : vector<2x256xf32>
    %109 = tpu.matmul %105, %6, %cst_19 {dimension_numbers = #tpu.dot_dimension_numbers<[1], [0], [0], [1], [0, 0, 1, 1], [], []>} : vector<2x64xf32>, vector<64x256xf32>, vector<2x256xf32> -> vector<2x256xf32>
    %110 = arith.addf %108, %109 : vector<2x256xf32>
    %111 = vector.extract_strided_slice %110 {offsets = [0, 0], sizes = [2, 128], strides = [1, 1]} : vector<2x256xf32> to vector<2x128xf32>
    %112 = arith.negf %111 : vector<2x128xf32>
    %113 = math.exp %112 : vector<2x128xf32>
    %cst_20 = arith.constant 1.000000e+00 : f32
    %114 = vector.broadcast %cst_20 : f32 to vector<2x128xf32>
    %115 = arith.addf %114, %113 : vector<2x128xf32>
    %116 = arith.divf %114, %115 : vector<2x128xf32>
    %117 = vector.extract_strided_slice %110 {offsets = [0, 128], sizes = [2, 64], strides = [1, 1]} : vector<2x256xf32> to vector<2x64xf32>
    %118 = math.tanh %117 : vector<2x64xf32>
    %119 = vector.extract_strided_slice %110 {offsets = [0, 192], sizes = [2, 64], strides = [1, 1]} : vector<2x256xf32> to vector<2x64xf32>
    %120 = arith.negf %119 : vector<2x64xf32>
    %121 = math.exp %120 : vector<2x64xf32>
    %cst_21 = arith.constant 1.000000e+00 : f32
    %122 = vector.broadcast %cst_21 : f32 to vector<2x64xf32>
    %123 = arith.addf %122, %121 : vector<2x64xf32>
    %124 = arith.divf %122, %123 : vector<2x64xf32>
    %125 = vector.extract_strided_slice %116 {offsets = [0, 0], sizes = [2, 64], strides = [1, 1]} : vector<2x128xf32> to vector<2x64xf32>
    %126 = vector.extract_strided_slice %116 {offsets = [0, 64], sizes = [2, 64], strides = [1, 1]} : vector<2x128xf32> to vector<2x64xf32>
    %127 = arith.mulf %126, %103 : vector<2x64xf32>
    %128 = arith.mulf %125, %118 : vector<2x64xf32>
    %129 = arith.addf %127, %128 : vector<2x64xf32>
    %130 = math.tanh %129 : vector<2x64xf32>
    %131 = arith.mulf %124, %130 : vector<2x64xf32>
    %132 = vector.extract_strided_slice %5 {offsets = [8, 0], sizes = [2, 256], strides = [1, 1]} : vector<16x256xf32> to vector<2x256xf32>
    %133 = vector.extract_strided_slice %5 {offsets = [6, 0], sizes = [2, 256], strides = [1, 1]} : vector<16x256xf32> to vector<2x256xf32>
    %134 = arith.select %25, %132, %133 : vector<2x256xi1>, vector<2x256xf32>
    %cst_22 = arith.constant dense<0.000000e+00> : vector<2x256xf32>
    %135 = tpu.matmul %131, %6, %cst_22 {dimension_numbers = #tpu.dot_dimension_numbers<[1], [0], [0], [1], [0, 0, 1, 1], [], []>} : vector<2x64xf32>, vector<64x256xf32>, vector<2x256xf32> -> vector<2x256xf32>
    %136 = arith.addf %134, %135 : vector<2x256xf32>
    %137 = vector.extract_strided_slice %136 {offsets = [0, 0], sizes = [2, 128], strides = [1, 1]} : vector<2x256xf32> to vector<2x128xf32>
    %138 = arith.negf %137 : vector<2x128xf32>
    %139 = math.exp %138 : vector<2x128xf32>
    %cst_23 = arith.constant 1.000000e+00 : f32
    %140 = vector.broadcast %cst_23 : f32 to vector<2x128xf32>
    %141 = arith.addf %140, %139 : vector<2x128xf32>
    %142 = arith.divf %140, %141 : vector<2x128xf32>
    %143 = vector.extract_strided_slice %136 {offsets = [0, 128], sizes = [2, 64], strides = [1, 1]} : vector<2x256xf32> to vector<2x64xf32>
    %144 = math.tanh %143 : vector<2x64xf32>
    %145 = vector.extract_strided_slice %136 {offsets = [0, 192], sizes = [2, 64], strides = [1, 1]} : vector<2x256xf32> to vector<2x64xf32>
    %146 = arith.negf %145 : vector<2x64xf32>
    %147 = math.exp %146 : vector<2x64xf32>
    %cst_24 = arith.constant 1.000000e+00 : f32
    %148 = vector.broadcast %cst_24 : f32 to vector<2x64xf32>
    %149 = arith.addf %148, %147 : vector<2x64xf32>
    %150 = arith.divf %148, %149 : vector<2x64xf32>
    %151 = vector.extract_strided_slice %142 {offsets = [0, 0], sizes = [2, 64], strides = [1, 1]} : vector<2x128xf32> to vector<2x64xf32>
    %152 = vector.extract_strided_slice %142 {offsets = [0, 64], sizes = [2, 64], strides = [1, 1]} : vector<2x128xf32> to vector<2x64xf32>
    %153 = arith.mulf %152, %129 : vector<2x64xf32>
    %154 = arith.mulf %151, %144 : vector<2x64xf32>
    %155 = arith.addf %153, %154 : vector<2x64xf32>
    %156 = math.tanh %155 : vector<2x64xf32>
    %157 = arith.mulf %150, %156 : vector<2x64xf32>
    %158 = vector.extract_strided_slice %5 {offsets = [10, 0], sizes = [2, 256], strides = [1, 1]} : vector<16x256xf32> to vector<2x256xf32>
    %159 = vector.extract_strided_slice %5 {offsets = [4, 0], sizes = [2, 256], strides = [1, 1]} : vector<16x256xf32> to vector<2x256xf32>
    %160 = arith.select %25, %158, %159 : vector<2x256xi1>, vector<2x256xf32>
    %cst_25 = arith.constant dense<0.000000e+00> : vector<2x256xf32>
    %161 = tpu.matmul %157, %6, %cst_25 {dimension_numbers = #tpu.dot_dimension_numbers<[1], [0], [0], [1], [0, 0, 1, 1], [], []>} : vector<2x64xf32>, vector<64x256xf32>, vector<2x256xf32> -> vector<2x256xf32>
    %162 = arith.addf %160, %161 : vector<2x256xf32>
    %163 = vector.extract_strided_slice %162 {offsets = [0, 0], sizes = [2, 128], strides = [1, 1]} : vector<2x256xf32> to vector<2x128xf32>
    %164 = arith.negf %163 : vector<2x128xf32>
    %165 = math.exp %164 : vector<2x128xf32>
    %cst_26 = arith.constant 1.000000e+00 : f32
    %166 = vector.broadcast %cst_26 : f32 to vector<2x128xf32>
    %167 = arith.addf %166, %165 : vector<2x128xf32>
    %168 = arith.divf %166, %167 : vector<2x128xf32>
    %169 = vector.extract_strided_slice %162 {offsets = [0, 128], sizes = [2, 64], strides = [1, 1]} : vector<2x256xf32> to vector<2x64xf32>
    %170 = math.tanh %169 : vector<2x64xf32>
    %171 = vector.extract_strided_slice %162 {offsets = [0, 192], sizes = [2, 64], strides = [1, 1]} : vector<2x256xf32> to vector<2x64xf32>
    %172 = arith.negf %171 : vector<2x64xf32>
    %173 = math.exp %172 : vector<2x64xf32>
    %cst_27 = arith.constant 1.000000e+00 : f32
    %174 = vector.broadcast %cst_27 : f32 to vector<2x64xf32>
    %175 = arith.addf %174, %173 : vector<2x64xf32>
    %176 = arith.divf %174, %175 : vector<2x64xf32>
    %177 = vector.extract_strided_slice %168 {offsets = [0, 0], sizes = [2, 64], strides = [1, 1]} : vector<2x128xf32> to vector<2x64xf32>
    %178 = vector.extract_strided_slice %168 {offsets = [0, 64], sizes = [2, 64], strides = [1, 1]} : vector<2x128xf32> to vector<2x64xf32>
    %179 = arith.mulf %178, %155 : vector<2x64xf32>
    %180 = arith.mulf %177, %170 : vector<2x64xf32>
    %181 = arith.addf %179, %180 : vector<2x64xf32>
    %182 = math.tanh %181 : vector<2x64xf32>
    %183 = arith.mulf %176, %182 : vector<2x64xf32>
    %184 = vector.extract_strided_slice %5 {offsets = [12, 0], sizes = [2, 256], strides = [1, 1]} : vector<16x256xf32> to vector<2x256xf32>
    %185 = vector.extract_strided_slice %5 {offsets = [2, 0], sizes = [2, 256], strides = [1, 1]} : vector<16x256xf32> to vector<2x256xf32>
    %186 = arith.select %25, %184, %185 : vector<2x256xi1>, vector<2x256xf32>
    %cst_28 = arith.constant dense<0.000000e+00> : vector<2x256xf32>
    %187 = tpu.matmul %183, %6, %cst_28 {dimension_numbers = #tpu.dot_dimension_numbers<[1], [0], [0], [1], [0, 0, 1, 1], [], []>} : vector<2x64xf32>, vector<64x256xf32>, vector<2x256xf32> -> vector<2x256xf32>
    %188 = arith.addf %186, %187 : vector<2x256xf32>
    %189 = vector.extract_strided_slice %188 {offsets = [0, 0], sizes = [2, 128], strides = [1, 1]} : vector<2x256xf32> to vector<2x128xf32>
    %190 = arith.negf %189 : vector<2x128xf32>
    %191 = math.exp %190 : vector<2x128xf32>
    %cst_29 = arith.constant 1.000000e+00 : f32
    %192 = vector.broadcast %cst_29 : f32 to vector<2x128xf32>
    %193 = arith.addf %192, %191 : vector<2x128xf32>
    %194 = arith.divf %192, %193 : vector<2x128xf32>
    %195 = vector.extract_strided_slice %188 {offsets = [0, 128], sizes = [2, 64], strides = [1, 1]} : vector<2x256xf32> to vector<2x64xf32>
    %196 = math.tanh %195 : vector<2x64xf32>
    %197 = vector.extract_strided_slice %188 {offsets = [0, 192], sizes = [2, 64], strides = [1, 1]} : vector<2x256xf32> to vector<2x64xf32>
    %198 = arith.negf %197 : vector<2x64xf32>
    %199 = math.exp %198 : vector<2x64xf32>
    %cst_30 = arith.constant 1.000000e+00 : f32
    %200 = vector.broadcast %cst_30 : f32 to vector<2x64xf32>
    %201 = arith.addf %200, %199 : vector<2x64xf32>
    %202 = arith.divf %200, %201 : vector<2x64xf32>
    %203 = vector.extract_strided_slice %194 {offsets = [0, 0], sizes = [2, 64], strides = [1, 1]} : vector<2x128xf32> to vector<2x64xf32>
    %204 = vector.extract_strided_slice %194 {offsets = [0, 64], sizes = [2, 64], strides = [1, 1]} : vector<2x128xf32> to vector<2x64xf32>
    %205 = arith.mulf %204, %181 : vector<2x64xf32>
    %206 = arith.mulf %203, %196 : vector<2x64xf32>
    %207 = arith.addf %205, %206 : vector<2x64xf32>
    %208 = math.tanh %207 : vector<2x64xf32>
    %209 = arith.mulf %202, %208 : vector<2x64xf32>
    %210 = vector.extract_strided_slice %5 {offsets = [14, 0], sizes = [2, 256], strides = [1, 1]} : vector<16x256xf32> to vector<2x256xf32>
    %211 = vector.extract_strided_slice %5 {offsets = [0, 0], sizes = [2, 256], strides = [1, 1]} : vector<16x256xf32> to vector<2x256xf32>
    %212 = arith.select %25, %210, %211 : vector<2x256xi1>, vector<2x256xf32>
    %cst_31 = arith.constant dense<0.000000e+00> : vector<2x256xf32>
    %213 = tpu.matmul %209, %6, %cst_31 {dimension_numbers = #tpu.dot_dimension_numbers<[1], [0], [0], [1], [0, 0, 1, 1], [], []>} : vector<2x64xf32>, vector<64x256xf32>, vector<2x256xf32> -> vector<2x256xf32>
    %214 = arith.addf %212, %213 : vector<2x256xf32>
    %215 = vector.extract_strided_slice %214 {offsets = [0, 0], sizes = [2, 128], strides = [1, 1]} : vector<2x256xf32> to vector<2x128xf32>
    %216 = arith.negf %215 : vector<2x128xf32>
    %217 = math.exp %216 : vector<2x128xf32>
    %cst_32 = arith.constant 1.000000e+00 : f32
    %218 = vector.broadcast %cst_32 : f32 to vector<2x128xf32>
    %219 = arith.addf %218, %217 : vector<2x128xf32>
    %220 = arith.divf %218, %219 : vector<2x128xf32>
    %221 = vector.extract_strided_slice %214 {offsets = [0, 128], sizes = [2, 64], strides = [1, 1]} : vector<2x256xf32> to vector<2x64xf32>
    %222 = math.tanh %221 : vector<2x64xf32>
    %223 = vector.extract_strided_slice %214 {offsets = [0, 192], sizes = [2, 64], strides = [1, 1]} : vector<2x256xf32> to vector<2x64xf32>
    %224 = arith.negf %223 : vector<2x64xf32>
    %225 = math.exp %224 : vector<2x64xf32>
    %cst_33 = arith.constant 1.000000e+00 : f32
    %226 = vector.broadcast %cst_33 : f32 to vector<2x64xf32>
    %227 = arith.addf %226, %225 : vector<2x64xf32>
    %228 = arith.divf %226, %227 : vector<2x64xf32>
    %229 = vector.extract_strided_slice %220 {offsets = [0, 0], sizes = [2, 64], strides = [1, 1]} : vector<2x128xf32> to vector<2x64xf32>
    %230 = vector.extract_strided_slice %220 {offsets = [0, 64], sizes = [2, 64], strides = [1, 1]} : vector<2x128xf32> to vector<2x64xf32>
    %231 = arith.mulf %230, %207 : vector<2x64xf32>
    %232 = arith.mulf %229, %222 : vector<2x64xf32>
    %233 = arith.addf %231, %232 : vector<2x64xf32>
    %234 = math.tanh %233 : vector<2x64xf32>
    %235 = arith.mulf %228, %234 : vector<2x64xf32>
    %cst_34 = arith.constant 0.000000e+00 : f32
    %236 = vector.broadcast %cst_34 : f32 to vector<2x64xf32>
    %237 = arith.maximumf %235, %236 : vector<2x64xf32>
    %c88 = arith.constant 88 : index
    %c0_35 = arith.constant 0 : index
    %238 = vector.load %arg1[%c88, %c0_35] : memref<200x256xf32, #tpu.memory_space<vmem>>, vector<64x32xf32>
    %cst_36 = arith.constant dense<0.000000e+00> : vector<2x32xf32>
    %239 = tpu.matmul %237, %238, %cst_36 {dimension_numbers = #tpu.dot_dimension_numbers<[1], [0], [0], [1], [0, 0, 1, 1], [], []>} : vector<2x64xf32>, vector<64x32xf32>, vector<2x32xf32> -> vector<2x32xf32>
    %c152 = arith.constant 152 : index
    %c0_37 = arith.constant 0 : index
    %240 = vector.load %arg1[%c152, %c0_37] : memref<200x256xf32, #tpu.memory_space<vmem>>, vector<1x32xf32>
    %241 = vector.broadcast %240 : vector<1x32xf32> to vector<2x32xf32>
    %242 = arith.addf %239, %241 : vector<2x32xf32>
    %c160 = arith.constant 160 : index
    %c0_38 = arith.constant 0 : index
    %243 = vector.load %arg1[%c160, %c0_38] : memref<200x256xf32, #tpu.memory_space<vmem>>, vector<32x4xf32>
    %cst_39 = arith.constant dense<0.000000e+00> : vector<2x4xf32>
    %244 = tpu.matmul %242, %243, %cst_39 {dimension_numbers = #tpu.dot_dimension_numbers<[1], [0], [0], [1], [0, 0, 1, 1], [], []>} : vector<2x32xf32>, vector<32x4xf32>, vector<2x4xf32> -> vector<2x4xf32>
    %c192 = arith.constant 192 : index
    %c0_40 = arith.constant 0 : index
    %245 = vector.load %arg1[%c192, %c0_40] : memref<200x256xf32, #tpu.memory_space<vmem>>, vector<1x4xf32>
    %246 = vector.broadcast %245 : vector<1x4xf32> to vector<2x4xf32>
    %247 = arith.addf %244, %246 : vector<2x4xf32>
    %c0_41 = arith.constant 0 : index
    %c0_42 = arith.constant 0 : index
    %248 = vector.load %arg2[%c0_41, %c0_42] : memref<2x4xf32, #tpu.memory_space<vmem>>, vector<2x4xf32>
    tpu.vector_store %arg2[%c0_41, %c0_42], %247 {strides = array<i32>} : memref<2x4xf32, #tpu.memory_space<vmem>>, vector<2x4xf32>,
    return
  }
}

</mosaic_0001>

<llo_original>
// kernel: tpu_custom_call.1
$region0: #{tpu_custom_call.1}
  #allocation0 [shape = 'u32[]', space=smem, size = 0x4, offset = 0x4, fixed_abs, tag = 'smem constant byte address 0x4 - core index']
  #allocation1 [shape = 'u32[144,128]{1,0:T(1,128)}', space=vmem, size = 0x12000, scoped, tag = 'internal scratch']
  %s0 = inlined_call_operand.hbm [shape: f32[16,16], index: 0, kind: input, shape index: {}]
  %s1 = inlined_call_operand.hbm [shape: f32[200,256], index: 1, kind: input, shape index: {}]
  %s2 = inlined_call_operand.hbm [shape: f32[2,4], index: 2, kind: output, shape index: {}]
  %s3 = sld [smem:[#allocation0]]
  $region26: #{tpu_custom_call.1} parent=0
    _
  %s5 = ssub.s32 1, %s3
  %s6 = scalar_select 0, %s5, %s3
  $region1: #{tpu_custom_call.1} parent=0
    #allocation2 [shape = 'u8[8192]{0}', space=vmem, size = 0x2000, scoped, tag = 'input window, operand 0, single buffered']
    #allocation3 [shape = 's32[1]{0}', space=sflag, size = 0x4, scoped, tag = 'scoped memory for tpu_custom_call.1']
    #allocation4 [shape = 's32[1]{0}', space=sflag, size = 0x4, scoped, tag = 'scoped memory for tpu_custom_call.1']
    #allocation5 [shape = 'u8[204800]{0}', space=vmem, size = 0x32000, scoped, tag = 'input window, operand 1, single buffered']
    #allocation6 [shape = 's32[1]{0}', space=sflag, size = 0x4, scoped, tag = 'scoped memory for tpu_custom_call.1']
    #allocation7 [shape = 'u8[1024]{0}', space=vmem, size = 0x400, scoped, tag = 'output window, operand 0, single buffered']
    %7 = vsyncpa [#allocation3], 0
    %8 = vsyncpa [#allocation6], 0
    %9 = vsyncpa [#allocation4], 0
    // Predicated region
    $region2: #{tpu_custom_call.1} parent=1 // pred_check
      _
    $region3: #{tpu_custom_call.1} parent=1 // pred_check_branch
      %11 = sbr.rel (0) target = $region5
    $region4: #{tpu_custom_call.1} parent=1 // pred_region
      %s13 = ssub.s32 256, 256
      %14 = vsyncadd [#allocation3], %s13
      %s15 = sshll.u32 [#allocation2], 4
      %s16 = int_to_ptr.vmem [resolvable:$true] %s15
      %21 = dma.hbm_to_vmem [thread:$0]  %s0, 256, %s16, [#allocation3], 128, 128, 8
    $region5: #{tpu_custom_call.1} parent=1 // pred_fallthru
      _
    // Predicated region
    $region6: #{tpu_custom_call.1} parent=1 // pred_check
      _
    $region7: #{tpu_custom_call.1} parent=1 // pred_check_branch
      %23 = sbr.rel (0) target = $region9
    $region8: #{tpu_custom_call.1} parent=1 // pred_region
      %s25 = ssub.s32 6400, 6400
      %26 = vsyncadd [#allocation6], %s25
      %s27 = sshll.u32 [#allocation5], 4
      %s28 = int_to_ptr.vmem [resolvable:$true] %s27
      %33 = dma.hbm_to_vmem [thread:$0]  %s1, 6400, %s28, [#allocation6], 256, 256, 16
    $region9: #{tpu_custom_call.1} parent=1 // pred_fallthru
      _
    // Predicated region
    $region10: #{tpu_custom_call.1} parent=1 // pred_check
      _
    $region11: #{tpu_custom_call.1} parent=1 // pred_check_branch
      %35 = sbr.rel (0) target = $region13
    $region12: #{tpu_custom_call.1} parent=1 // pred_region
      %36 = dma.done [#allocation3], 256
    $region13: #{tpu_custom_call.1} parent=1 // pred_fallthru
      _
    // Predicated region
    $region14: #{tpu_custom_call.1} parent=1 // pred_check
      _
    $region15: #{tpu_custom_call.1} parent=1 // pred_check_branch
      %38 = sbr.rel (0) target = $region17
    $region16: #{tpu_custom_call.1} parent=1 // pred_region
      %39 = dma.done [#allocation6], 6400
    $region17: #{tpu_custom_call.1} parent=1 // pred_fallthru
      _
    %v40 = vld [vmem:[#allocation2] sm:$0xff]
    %v41 = vld [vmem:[#allocation2 + $0x8] sm:$0xff]
    %v42 = vld [vmem:[#allocation5] sm:$0xff]
    %v43 = vld [vmem:[#allocation5 + $0x8] sm:$0xff]
    %v44 = vld [vmem:[#allocation5 + $0x10] sm:$0xff]
    %v45 = vld [vmem:[#allocation5 + $0x18] sm:$0xff]
    %s46 = scalar_lea.vmem [#allocation5], 32
    %v47 = vld [vmem:[%s46] ss:$8 sm:$0x3]
    %v49 = vlaneseq
    %v50 = vshrl.u32 %v49, 7
    %v51 = vsub.s32 0, %v50
    %v52 = vrot.slane %v47, %v51
    %v53 = vlaneseq
    %v54 = vshrl.u32 %v53, 7
    %v55 = vsub.s32 1, %v54
    %v56 = vrot.slane %v47, %v55
    %vm59 = vcmask 130048
    %v61 = vsel %vm59, %v40, 0
    %v64 = vsel %vm59, %v41, 0
    %66 = vmatprep.subr.mxu0 0.0
    %67 = vmatpush1.msra.mxu0 0.0
    %68 = vmatprep.subr.mxu0 0.0
    %69 = vmatpush1.msra.mxu0 0.0
    %70 = vmatprep.subr.mxu0 0.0
    %71 = vmatpush1.msra.mxu0 0.0
    %72 = vmatprep.subr.mxu0 0.0
    %73 = vmatpush1.msra.mxu0 0.0
    %74 = vmatprep.subr.mxu0 0.0
    %75 = vmatpush1.msra.mxu0 0.0
    %76 = vmatprep.subr.mxu0 0.0
    %77 = vmatpush1.msra.mxu0 0.0
    %78 = vmatprep.subr.mxu0 0.0
    %79 = vmatpush1.msra.mxu0 0.0
    %80 = vmatprep.subr.mxu0 0.0
    %81 = vmatpush1.msra.mxu0 0.0
    %82 = vmatprep.subr.mxu0 0.0
    %83 = vmatpush1.msra.mxu0 0.0
    %84 = vmatprep.subr.mxu0 0.0
    %85 = vmatpush1.msra.mxu0 0.0
    %86 = vmatprep.subr.mxu0 0.0
    %87 = vmatpush1.msra.mxu0 0.0
    %88 = vmatprep.subr.mxu0 0.0
    %89 = vmatpush1.msra.mxu0 0.0
    %90 = vmatprep.subr.mxu0 0.0
    %91 = vmatpush1.msra.mxu0 0.0
    %92 = vmatprep.subr.mxu0 0.0
    %93 = vmatpush1.msra.mxu0 0.0
    %94 = vmatprep.subr.mxu0 %v45
    %95 = vmatpush1.msra.mxu0 %v44
    %96 = vmatprep.subr.mxu0 %v43
    %97 = vmatpush1.msra.mxu0 %v42
    %98 = vmatprep.subr.mxu0 0.0
    %99 = vmatpush2.msra.mxu0 0.0
    %100 = vmatprep.subr.mxu0 0.0
    %101 = vmatpush2.msra.mxu0 0.0
    %102 = vmatprep.subr.mxu0 0.0
    %103 = vmatpush2.msra.mxu0 0.0
    %104 = vmatprep.subr.mxu0 0.0
    %105 = vmatpush2.msra.mxu0 0.0
    %106 = vmatprep.subr.mxu0 0.0
    %107 = vmatpush2.msra.mxu0 0.0
    %108 = vmatprep.subr.mxu0 0.0
    %109 = vmatpush2.msra.mxu0 0.0
    %110 = vmatprep.subr.mxu0 0.0
    %111 = vmatpush2.msra.mxu0 0.0
    %112 = vmatprep.subr.mxu0 0.0
    %113 = vmatpush2.msra.mxu0 0.0
    %114 = vmatprep.subr.mxu0 0.0
    %115 = vmatpush2.msra.mxu0 0.0
    %116 = vmatprep.subr.mxu0 0.0
    %117 = vmatpush2.msra.mxu0 0.0
    %118 = vmatprep.subr.mxu0 0.0
    %119 = vmatpush2.msra.mxu0 0.0
    %120 = vmatprep.subr.mxu0 0.0
    %121 = vmatpush2.msra.mxu0 0.0
    %122 = vmatprep.subr.mxu0 0.0
    %123 = vmatpush2.msra.mxu0 0.0
    %124 = vmatprep.subr.mxu0 0.0
    %125 = vmatpush2.msra.mxu0 0.0
    %126 = vmatprep.subr.mxu0 0.0
    %127 = vmatpush2.msra.mxu0 0.0
    %128 = vmatprep.subr.mxu0 0.0
    %129 = vmatpush2.msra.mxu0 0.0
    %130 = vmatprep.mubr.f32.mxu0 0.0
    %131 = vmatmul.mubr.f32.gmra.mxu0 %v61
    %v132 = vpop.f32.mrf.mxu0
    %v133 = vadd.f32 %v52, %v132
    %v134 = vpop.f32.mrf.mxu0
    %v135 = vadd.f32 %v56, %v134
    %136 = vmatprep.mubr.f32.mxu0 0.0
    %137 = vmatmul.mubr.f32.gmra.mxu0 %v64
    %v138 = vpop.f32.mrf.mxu0
    %v139 = vadd.f32 %v52, %v138
    %v140 = vpop.f32.mrf.mxu0
    %v141 = vadd.f32 %v56, %v140
    %142 = vdwg.mxu0
    %v143 = vld [vmem:[#allocation5 + $0x30] sm:$0xff]
    %v144 = vld [vmem:[#allocation5 + $0x38] sm:$0xff]
    %v145 = vld [vmem:[#allocation5 + $0x40] sm:$0xff]
    %v146 = vld [vmem:[#allocation5 + $0x48] sm:$0xff]
    %v147 = vld [vmem:[#allocation5 + $0x50] sm:$0xff]
    %v148 = vld [vmem:[#allocation5 + $0x58] sm:$0xff]
    %v149 = vld [vmem:[#allocation5 + $0x60] sm:$0xff]
    %v150 = vld [vmem:[#allocation5 + $0x68] sm:$0xff]
    %v151 = vld [vmem:[#allocation5 + $0x70] sm:$0xff]
    %v152 = vld [vmem:[#allocation5 + $0x78] sm:$0xff]
    %v153 = vld [vmem:[#allocation5 + $0x80] sm:$0xff]
    %v154 = vld [vmem:[#allocation5 + $0x88] sm:$0xff]
    %v155 = vld [vmem:[#allocation5 + $0x90] sm:$0xff]
    %v156 = vld [vmem:[#allocation5 + $0x98] sm:$0xff]
    %v157 = vld [vmem:[#allocation5 + $0xa0] sm:$0xff]
    %v158 = vld [vmem:[#allocation5 + $0xa8] sm:$0xff]
    %v159 = vlaneseq
    %v160 = vand.u32 %v159, 127
    %v161 = vadd.s32 %v160, 128
    %vm162 = vcmp.lt.s32.totalorder %v160, 0
    %v163 = vsub.s32 0, %v160
    %v164 = vsel %vm162, %v163, %v160
    %v165 = vshrl.u32 %v164, 6
    %v166 = vand.u32 %v164, 63
    %v167 = vsub.s32 0, %v166
    %v168 = vsel %vm162, %v167, %v166
    %vm169 = vcmp.lt.s32.totalorder %v161, 0
    %v170 = vsub.s32 0, %v161
    %v171 = vsel %vm169, %v170, %v161
    %v172 = vshrl.u32 %v171, 6
    %v173 = vand.u32 %v171, 63
    %v174 = vsub.s32 0, %v173
    %v175 = vsel %vm169, %v174, %v173
    %vm176 = vcmp.ne.s32.totalorder %v168, 0
    %vm177 = vcmp.ne.s32.totalorder %v175, 0
    %vm178 = vcmp.lt.s32.totalorder %v168, 0
    %vm179 = vcmp.lt.s32.totalorder %v175, 0
    %vm180 = vmand %vm178, %vm176
    %vm181 = vmand %vm179, %vm177
    %v182 = vadd.s32 %v168, 64
    %v183 = vadd.s32 %v175, 64
    %v184 = vsel %vm180, %v182, %v168
    %v185 = vsel %vm181, %v183, %v175
    %vm186 = vcmp.lt.s32.totalorder %v184, 32
    %vm187 = vcmp.lt.s32.totalorder %v185, 32
    %v190 = vrot.slane %v139, 6
    %v191 = vrot.slane %v141, 6
    %v194 = vsel %vm186, %v133, %v190
    %v195 = vsel %vm187, %v135, %v191
    %vm196 = vcmask 523264
    %v198 = vsel %vm196, 0.0, 0
    %200 = vmatprep.subr.mxu0 0.0
    %201 = vmatpush1.msra.mxu0 0.0
    %202 = vmatprep.subr.mxu0 0.0
    %203 = vmatpush1.msra.mxu0 0.0
    %204 = vmatprep.subr.mxu0 0.0
    %205 = vmatpush1.msra.mxu0 0.0
    %206 = vmatprep.subr.mxu0 0.0
    %207 = vmatpush1.msra.mxu0 0.0
    %208 = vmatprep.subr.mxu0 0.0
    %209 = vmatpush1.msra.mxu0 0.0
    %210 = vmatprep.subr.mxu0 0.0
    %211 = vmatpush1.msra.mxu0 0.0
    %212 = vmatprep.subr.mxu0 0.0
    %213 = vmatpush1.msra.mxu0 0.0
    %214 = vmatprep.subr.mxu0 0.0
    %215 = vmatpush1.msra.mxu0 0.0
    %216 = vmatprep.subr.mxu0 %v158
    %217 = vmatpush1.msra.mxu0 %v157
    %218 = vmatprep.subr.mxu0 %v156
    %219 = vmatpush1.msra.mxu0 %v155
    %220 = vmatprep.subr.mxu0 %v154
    %221 = vmatpush1.msra.mxu0 %v153
    %222 = vmatprep.subr.mxu0 %v152
    %223 = vmatpush1.msra.mxu0 %v151
    %224 = vmatprep.subr.mxu0 %v150
    %225 = vmatpush1.msra.mxu0 %v149
    %226 = vmatprep.subr.mxu0 %v148
    %227 = vmatpush1.msra.mxu0 %v147
    %228 = vmatprep.subr.mxu0 %v146
    %229 = vmatpush1.msra.mxu0 %v145
    %230 = vmatprep.subr.mxu0 %v144
    %231 = vmatpush1.msra.mxu0 %v143
    %232 = vmatprep.subr.mxu0 0.0
    %233 = vmatpush2.msra.mxu0 0.0
    %234 = vmatprep.subr.mxu0 0.0
    %235 = vmatpush2.msra.mxu0 0.0
    %236 = vmatprep.subr.mxu0 0.0
    %237 = vmatpush2.msra.mxu0 0.0
    %238 = vmatprep.subr.mxu0 0.0
    %239 = vmatpush2.msra.mxu0 0.0
    %240 = vmatprep.subr.mxu0 0.0
    %241 = vmatpush2.msra.mxu0 0.0
    %242 = vmatprep.subr.mxu0 0.0
    %243 = vmatpush2.msra.mxu0 0.0
    %244 = vmatprep.subr.mxu0 0.0
    %245 = vmatpush2.msra.mxu0 0.0
    %246 = vmatprep.subr.mxu0 0.0
    %247 = vmatpush2.msra.mxu0 0.0
    %248 = vmatprep.subr.mxu0 0.0
    %249 = vmatpush2.msra.mxu0 0.0
    %250 = vmatprep.subr.mxu0 0.0
    %251 = vmatpush2.msra.mxu0 0.0
    %252 = vmatprep.subr.mxu0 0.0
    %253 = vmatpush2.msra.mxu0 0.0
    %254 = vmatprep.subr.mxu0 0.0
    %255 = vmatpush2.msra.mxu0 0.0
    %256 = vmatprep.subr.mxu0 0.0
    %257 = vmatpush2.msra.mxu0 0.0
    %258 = vmatprep.subr.mxu0 0.0
    %259 = vmatpush2.msra.mxu0 0.0
    %260 = vmatprep.subr.mxu0 0.0
    %261 = vmatpush2.msra.mxu0 0.0
    %262 = vmatprep.subr.mxu0 0.0
    %263 = vmatpush2.msra.mxu0 0.0
    %264 = vmatprep.mubr.f32.mxu0 0.0
    %265 = vmatmul.mubr.f32.gmra.mxu0 %v198
    %v266 = vpop.f32.mrf.mxu0
    %v267 = vadd.f32 0.0, %v266
    %v268 = vpop.f32.mrf.mxu0
    %v269 = vadd.f32 0.0, %v268
    %270 = vdwg.mxu0
    %v271 = vadd.f32 %v194, %v267
    %v272 = vadd.f32 %v195, %v269
    %v273 = vxor.u32 %v271, 2147483648
    %v274 = vmul.f32 %v273, 1.442695
    %v275 = vpow.pop %v274
    %v276 = vadd.f32 %v275, 1.0
    %v277 = vrcp.pop %v276
    %v278 = vmul.f32 1.0, %v277
    %v279 = vtanh.pop %v272
    %v280 = vxor.u32 %v272, 2147483648
    %v281 = vmul.f32 %v280, 1.442695
    %v282 = vpow.pop %v281
    %v283 = vadd.f32 %v282, 1.0
    %v284 = vrcp.pop %v283
    %v285 = vmul.f32 1.0, %v284
    %v286 = vmul.f32 %v278, 0.0
    %v287 = vmul.f32 %v278, %v279
    %289 = vrot.lane.b32.xlu0 %v287, 64
    %v290 = vpop.permute.xlu0 %289
    %v292 = vadd.f32 %v286, %v290
    %v293 = vtanh.pop %v292
    %v294 = vmul.f32 %v285, %v293
    %v295 = vrot.slane %v139, 2
    %v296 = vrot.slane %v141, 2
    %v299 = vsel %vm186, %v133, %v295
    %v300 = vsel %vm187, %v135, %v296
    %302 = vrot.lane.b32.xlu0 %v294, 64
    %v303 = vpop.permute.xlu0 %302
    %v304 = vsel %vm196, %v303, 0
    %306 = vmatprep.subr.mxu0 0.0
    %307 = vmatpush1.msra.mxu0 0.0
    %308 = vmatprep.subr.mxu0 0.0
    %309 = vmatpush1.msra.mxu0 0.0
    %310 = vmatprep.subr.mxu0 0.0
    %311 = vmatpush1.msra.mxu0 0.0
    %312 = vmatprep.subr.mxu0 0.0
    %313 = vmatpush1.msra.mxu0 0.0
    %314 = vmatprep.subr.mxu0 0.0
    %315 = vmatpush1.msra.mxu0 0.0
    %316 = vmatprep.subr.mxu0 0.0
    %317 = vmatpush1.msra.mxu0 0.0
    %318 = vmatprep.subr.mxu0 0.0
    %319 = vmatpush1.msra.mxu0 0.0
    %320 = vmatprep.subr.mxu0 0.0
    %321 = vmatpush1.msra.mxu0 0.0
    %322 = vmatprep.subr.mxu0 %v158
    %323 = vmatpush1.msra.mxu0 %v157
    %324 = vmatprep.subr.mxu0 %v156
    %325 = vmatpush1.msra.mxu0 %v155
    %326 = vmatprep.subr.mxu0 %v154
    %327 = vmatpush1.msra.mxu0 %v153
    %328 = vmatprep.subr.mxu0 %v152
    %329 = vmatpush1.msra.mxu0 %v151
    %330 = vmatprep.subr.mxu0 %v150
    %331 = vmatpush1.msra.mxu0 %v149
    %332 = vmatprep.subr.mxu0 %v148
    %333 = vmatpush1.msra.mxu0 %v147
    %334 = vmatprep.subr.mxu0 %v146
    %335 = vmatpush1.msra.mxu0 %v145
    %336 = vmatprep.subr.mxu0 %v144
    %337 = vmatpush1.msra.mxu0 %v143
    %338 = vmatprep.subr.mxu0 0.0
    %339 = vmatpush2.msra.mxu0 0.0
    %340 = vmatprep.subr.mxu0 0.0
    %341 = vmatpush2.msra.mxu0 0.0
    %342 = vmatprep.subr.mxu0 0.0
    %343 = vmatpush2.msra.mxu0 0.0
    %344 = vmatprep.subr.mxu0 0.0
    %345 = vmatpush2.msra.mxu0 0.0
    %346 = vmatprep.subr.mxu0 0.0
    %347 = vmatpush2.msra.mxu0 0.0
    %348 = vmatprep.subr.mxu0 0.0
    %349 = vmatpush2.msra.mxu0 0.0
    %350 = vmatprep.subr.mxu0 0.0
    %351 = vmatpush2.msra.mxu0 0.0
    %352 = vmatprep.subr.mxu0 0.0
    %353 = vmatpush2.msra.mxu0 0.0
    %354 = vmatprep.subr.mxu0 0.0
    %355 = vmatpush2.msra.mxu0 0.0
    %356 = vmatprep.subr.mxu0 0.0
    %357 = vmatpush2.msra.mxu0 0.0
    %358 = vmatprep.subr.mxu0 0.0
    %359 = vmatpush2.msra.mxu0 0.0
    %360 = vmatprep.subr.mxu0 0.0
    %361 = vmatpush2.msra.mxu0 0.0
    %362 = vmatprep.subr.mxu0 0.0
    %363 = vmatpush2.msra.mxu0 0.0
    %364 = vmatprep.subr.mxu0 0.0
    %365 = vmatpush2.msra.mxu0 0.0
    %366 = vmatprep.subr.mxu0 0.0
    %367 = vmatpush2.msra.mxu0 0.0
    %368 = vmatprep.subr.mxu0 0.0
    %369 = vmatpush2.msra.mxu0 0.0
    %370 = vmatprep.mubr.f32.mxu0 0.0
    %371 = vmatmul.mubr.f32.gmra.mxu0 %v304
    %v372 = vpop.f32.mrf.mxu0
    %v373 = vadd.f32 0.0, %v372
    %v374 = vpop.f32.mrf.mxu0
    %v375 = vadd.f32 0.0, %v374
    %376 = vdwg.mxu0
    %v379 = vrot.slane %v373, 6
    %v380 = vrot.slane %v375, 6
    %v383 = vadd.f32 %v299, %v379
    %v384 = vadd.f32 %v300, %v380
    %v385 = vxor.u32 %v383, 2147483648
    %v386 = vmul.f32 %v385, 1.442695
    %v387 = vpow.pop %v386
    %v388 = vadd.f32 %v387, 1.0
    %v389 = vrcp.pop %v388
    %v390 = vmul.f32 1.0, %v389
    %v391 = vtanh.pop %v384
    %v392 = vxor.u32 %v384, 2147483648
    %v393 = vmul.f32 %v392, 1.442695
    %v394 = vpow.pop %v393
    %v395 = vadd.f32 %v394, 1.0
    %v396 = vrcp.pop %v395
    %v397 = vmul.f32 1.0, %v396
    %v399 = vrot.slane %v292, 6
    %v401 = vmul.f32 %v390, %v399
    %v402 = vmul.f32 %v390, %v391
    %404 = vrot.lane.b32.xlu0 %v402, 64
    %v405 = vpop.permute.xlu0 %404
    %v407 = vadd.f32 %v401, %v405
    %v408 = vtanh.pop %v407
    %v409 = vmul.f32 %v397, %v408
    %v411 = vrot.slane %v409, 2
    %412 = vrot.lane.b32.xlu0 %v411, 64
    %v413 = vpop.permute.xlu0 %412
    %v414 = vsel %vm196, %v413, 0
    %416 = vmatprep.subr.mxu0 0.0
    %417 = vmatpush1.msra.mxu0 0.0
    %418 = vmatprep.subr.mxu0 0.0
    %419 = vmatpush1.msra.mxu0 0.0
    %420 = vmatprep.subr.mxu0 0.0
    %421 = vmatpush1.msra.mxu0 0.0
    %422 = vmatprep.subr.mxu0 0.0
    %423 = vmatpush1.msra.mxu0 0.0
    %424 = vmatprep.subr.mxu0 0.0
    %425 = vmatpush1.msra.mxu0 0.0
    %426 = vmatprep.subr.mxu0 0.0
    %427 = vmatpush1.msra.mxu0 0.0
    %428 = vmatprep.subr.mxu0 0.0
    %429 = vmatpush1.msra.mxu0 0.0
    %430 = vmatprep.subr.mxu0 0.0
    %431 = vmatpush1.msra.mxu0 0.0
    %432 = vmatprep.subr.mxu0 %v158
    %433 = vmatpush1.msra.mxu0 %v157
    %434 = vmatprep.subr.mxu0 %v156
    %435 = vmatpush1.msra.mxu0 %v155
    %436 = vmatprep.subr.mxu0 %v154
    %437 = vmatpush1.msra.mxu0 %v153
    %438 = vmatprep.subr.mxu0 %v152
    %439 = vmatpush1.msra.mxu0 %v151
    %440 = vmatprep.subr.mxu0 %v150
    %441 = vmatpush1.msra.mxu0 %v149
    %442 = vmatprep.subr.mxu0 %v148
    %443 = vmatpush1.msra.mxu0 %v147
    %444 = vmatprep.subr.mxu0 %v146
    %445 = vmatpush1.msra.mxu0 %v145
    %446 = vmatprep.subr.mxu0 %v144
    %447 = vmatpush1.msra.mxu0 %v143
    %448 = vmatprep.subr.mxu0 0.0
    %449 = vmatpush2.msra.mxu0 0.0
    %450 = vmatprep.subr.mxu0 0.0
    %451 = vmatpush2.msra.mxu0 0.0
    %452 = vmatprep.subr.mxu0 0.0
    %453 = vmatpush2.msra.mxu0 0.0
    %454 = vmatprep.subr.mxu0 0.0
    %455 = vmatpush2.msra.mxu0 0.0
    %456 = vmatprep.subr.mxu0 0.0
    %457 = vmatpush2.msra.mxu0 0.0
    %458 = vmatprep.subr.mxu0 0.0
    %459 = vmatpush2.msra.mxu0 0.0
    %460 = vmatprep.subr.mxu0 0.0
    %461 = vmatpush2.msra.mxu0 0.0
    %462 = vmatprep.subr.mxu0 0.0
    %463 = vmatpush2.msra.mxu0 0.0
    %464 = vmatprep.subr.mxu0 0.0
    %465 = vmatpush2.msra.mxu0 0.0
    %466 = vmatprep.subr.mxu0 0.0
    %467 = vmatpush2.msra.mxu0 0.0
    %468 = vmatprep.subr.mxu0 0.0
    %469 = vmatpush2.msra.mxu0 0.0
    %470 = vmatprep.subr.mxu0 0.0
    %471 = vmatpush2.msra.mxu0 0.0
    %472 = vmatprep.subr.mxu0 0.0
    %473 = vmatpush2.msra.mxu0 0.0
    %474 = vmatprep.subr.mxu0 0.0
    %475 = vmatpush2.msra.mxu0 0.0
    %476 = vmatprep.subr.mxu0 0.0
    %477 = vmatpush2.msra.mxu0 0.0
    %478 = vmatprep.subr.mxu0 0.0
    %479 = vmatpush2.msra.mxu0 0.0
    %480 = vmatprep.mubr.f32.mxu0 0.0
    %481 = vmatmul.mubr.f32.gmra.mxu0 %v414
    %v482 = vpop.f32.mrf.mxu0
    %v483 = vadd.f32 0.0, %v482
    %v484 = vpop.f32.mrf.mxu0
    %v485 = vadd.f32 0.0, %v484
    %486 = vdwg.mxu0
    %v489 = vrot.slane %v483, 4
    %v490 = vrot.slane %v485, 4
    %v493 = vadd.f32 %v194, %v489
    %v494 = vadd.f32 %v195, %v490
    %v495 = vxor.u32 %v493, 2147483648
    %v496 = vmul.f32 %v495, 1.442695
    %v497 = vpow.pop %v496
    %v498 = vadd.f32 %v497, 1.0
    %v499 = vrcp.pop %v498
    %v500 = vmul.f32 1.0, %v499
    %v501 = vtanh.pop %v494
    %v502 = vxor.u32 %v494, 2147483648
    %v503 = vmul.f32 %v502, 1.442695
    %v504 = vpow.pop %v503
    %v505 = vadd.f32 %v504, 1.0
    %v506 = vrcp.pop %v505
    %v507 = vmul.f32 1.0, %v506
    %v509 = vrot.slane %v407, 6
    %v511 = vmul.f32 %v500, %v509
    %v512 = vmul.f32 %v500, %v501
    %514 = vrot.lane.b32.xlu0 %v512, 64
    %v515 = vpop.permute.xlu0 %514
    %v517 = vadd.f32 %v511, %v515
    %v518 = vtanh.pop %v517
    %v519 = vmul.f32 %v507, %v518
    %v521 = vrot.slane %v519, 4
    %522 = vrot.lane.b32.xlu0 %v521, 64
    %v523 = vpop.permute.xlu0 %522
    %v524 = vsel %vm196, %v523, 0
    %526 = vmatprep.subr.mxu0 0.0
    %527 = vmatpush1.msra.mxu0 0.0
    %528 = vmatprep.subr.mxu0 0.0
    %529 = vmatpush1.msra.mxu0 0.0
    %530 = vmatprep.subr.mxu0 0.0
    %531 = vmatpush1.msra.mxu0 0.0
    %532 = vmatprep.subr.mxu0 0.0
    %533 = vmatpush1.msra.mxu0 0.0
    %534 = vmatprep.subr.mxu0 0.0
    %535 = vmatpush1.msra.mxu0 0.0
    %536 = vmatprep.subr.mxu0 0.0
    %537 = vmatpush1.msra.mxu0 0.0
    %538 = vmatprep.subr.mxu0 0.0
    %539 = vmatpush1.msra.mxu0 0.0
    %540 = vmatprep.subr.mxu0 0.0
    %541 = vmatpush1.msra.mxu0 0.0
    %542 = vmatprep.subr.mxu0 %v158
    %543 = vmatpush1.msra.mxu0 %v157
    %544 = vmatprep.subr.mxu0 %v156
    %545 = vmatpush1.msra.mxu0 %v155
    %546 = vmatprep.subr.mxu0 %v154
    %547 = vmatpush1.msra.mxu0 %v153
    %548 = vmatprep.subr.mxu0 %v152
    %549 = vmatpush1.msra.mxu0 %v151
    %550 = vmatprep.subr.mxu0 %v150
    %551 = vmatpush1.msra.mxu0 %v149
    %552 = vmatprep.subr.mxu0 %v148
    %553 = vmatpush1.msra.mxu0 %v147
    %554 = vmatprep.subr.mxu0 %v146
    %555 = vmatpush1.msra.mxu0 %v145
    %556 = vmatprep.subr.mxu0 %v144
    %557 = vmatpush1.msra.mxu0 %v143
    %558 = vmatprep.subr.mxu0 0.0
    %559 = vmatpush2.msra.mxu0 0.0
    %560 = vmatprep.subr.mxu0 0.0
    %561 = vmatpush2.msra.mxu0 0.0
    %562 = vmatprep.subr.mxu0 0.0
    %563 = vmatpush2.msra.mxu0 0.0
    %564 = vmatprep.subr.mxu0 0.0
    %565 = vmatpush2.msra.mxu0 0.0
    %566 = vmatprep.subr.mxu0 0.0
    %567 = vmatpush2.msra.mxu0 0.0
    %568 = vmatprep.subr.mxu0 0.0
    %569 = vmatpush2.msra.mxu0 0.0
    %570 = vmatprep.subr.mxu0 0.0
    %571 = vmatpush2.msra.mxu0 0.0
    %572 = vmatprep.subr.mxu0 0.0
    %573 = vmatpush2.msra.mxu0 0.0
    %574 = vmatprep.subr.mxu0 0.0
    %575 = vmatpush2.msra.mxu0 0.0
    %576 = vmatprep.subr.mxu0 0.0
    %577 = vmatpush2.msra.mxu0 0.0
    %578 = vmatprep.subr.mxu0 0.0
    %579 = vmatpush2.msra.mxu0 0.0
    %580 = vmatprep.subr.mxu0 0.0
    %581 = vmatpush2.msra.mxu0 0.0
    %582 = vmatprep.subr.mxu0 0.0
    %583 = vmatpush2.msra.mxu0 0.0
    %584 = vmatprep.subr.mxu0 0.0
    %585 = vmatpush2.msra.mxu0 0.0
    %586 = vmatprep.subr.mxu0 0.0
    %587 = vmatpush2.msra.mxu0 0.0
    %588 = vmatprep.subr.mxu0 0.0
    %589 = vmatpush2.msra.mxu0 0.0
    %590 = vmatprep.mubr.f32.mxu0 0.0
    %591 = vmatmul.mubr.f32.gmra.mxu0 %v524
    %v592 = vpop.f32.mrf.mxu0
    %v593 = vadd.f32 0.0, %v592
    %v594 = vpop.f32.mrf.mxu0
    %v595 = vadd.f32 0.0, %v594
    %596 = vdwg.mxu0
    %v599 = vrot.slane %v593, 2
    %v600 = vrot.slane %v595, 2
    %v603 = vadd.f32 %v299, %v599
    %v604 = vadd.f32 %v300, %v600
    %v605 = vxor.u32 %v603, 2147483648
    %v606 = vmul.f32 %v605, 1.442695
    %v607 = vpow.pop %v606
    %v608 = vadd.f32 %v607, 1.0
    %v609 = vrcp.pop %v608
    %v610 = vmul.f32 1.0, %v609
    %v611 = vtanh.pop %v604
    %v612 = vxor.u32 %v604, 2147483648
    %v613 = vmul.f32 %v612, 1.442695
    %v614 = vpow.pop %v613
    %v615 = vadd.f32 %v614, 1.0
    %v616 = vrcp.pop %v615
    %v617 = vmul.f32 1.0, %v616
    %v619 = vrot.slane %v517, 6
    %v621 = vmul.f32 %v610, %v619
    %v622 = vmul.f32 %v610, %v611
    %624 = vrot.lane.b32.xlu0 %v622, 64
    %v625 = vpop.permute.xlu0 %624
    %v627 = vadd.f32 %v621, %v625
    %v628 = vtanh.pop %v627
    %v629 = vmul.f32 %v617, %v628
    %v632 = vrot.slane %v133, 6
    %v633 = vrot.slane %v135, 6
    %v636 = vsel %vm186, %v139, %v632
    %v637 = vsel %vm187, %v141, %v633
    %v639 = vrot.slane %v629, 6
    %640 = vrot.lane.b32.xlu0 %v639, 64
    %v641 = vpop.permute.xlu0 %640
    %v642 = vsel %vm196, %v641, 0
    %644 = vmatprep.subr.mxu0 0.0
    %645 = vmatpush1.msra.mxu0 0.0
    %646 = vmatprep.subr.mxu0 0.0
    %647 = vmatpush1.msra.mxu0 0.0
    %648 = vmatprep.subr.mxu0 0.0
    %649 = vmatpush1.msra.mxu0 0.0
    %650 = vmatprep.subr.mxu0 0.0
    %651 = vmatpush1.msra.mxu0 0.0
    %652 = vmatprep.subr.mxu0 0.0
    %653 = vmatpush1.msra.mxu0 0.0
    %654 = vmatprep.subr.mxu0 0.0
    %655 = vmatpush1.msra.mxu0 0.0
    %656 = vmatprep.subr.mxu0 0.0
    %657 = vmatpush1.msra.mxu0 0.0
    %658 = vmatprep.subr.mxu0 0.0
    %659 = vmatpush1.msra.mxu0 0.0
    %660 = vmatprep.subr.mxu0 %v158
    %661 = vmatpush1.msra.mxu0 %v157
    %662 = vmatprep.subr.mxu0 %v156
    %663 = vmatpush1.msra.mxu0 %v155
    %664 = vmatprep.subr.mxu0 %v154
    %665 = vmatpush1.msra.mxu0 %v153
    %666 = vmatprep.subr.mxu0 %v152
    %667 = vmatpush1.msra.mxu0 %v151
    %668 = vmatprep.subr.mxu0 %v150
    %669 = vmatpush1.msra.mxu0 %v149
    %670 = vmatprep.subr.mxu0 %v148
    %671 = vmatpush1.msra.mxu0 %v147
    %672 = vmatprep.subr.mxu0 %v146
    %673 = vmatpush1.msra.mxu0 %v145
    %674 = vmatprep.subr.mxu0 %v144
    %675 = vmatpush1.msra.mxu0 %v143
    %676 = vmatprep.subr.mxu0 0.0
    %677 = vmatpush2.msra.mxu0 0.0
    %678 = vmatprep.subr.mxu0 0.0
    %679 = vmatpush2.msra.mxu0 0.0
    %680 = vmatprep.subr.mxu0 0.0
    %681 = vmatpush2.msra.mxu0 0.0
    %682 = vmatprep.subr.mxu0 0.0
    %683 = vmatpush2.msra.mxu0 0.0
    %684 = vmatprep.subr.mxu0 0.0
    %685 = vmatpush2.msra.mxu0 0.0
    %686 = vmatprep.subr.mxu0 0.0
    %687 = vmatpush2.msra.mxu0 0.0
    %688 = vmatprep.subr.mxu0 0.0
    %689 = vmatpush2.msra.mxu0 0.0
    %690 = vmatprep.subr.mxu0 0.0
    %691 = vmatpush2.msra.mxu0 0.0
    %692 = vmatprep.subr.mxu0 0.0
    %693 = vmatpush2.msra.mxu0 0.0
    %694 = vmatprep.subr.mxu0 0.0
    %695 = vmatpush2.msra.mxu0 0.0
    %696 = vmatprep.subr.mxu0 0.0
    %697 = vmatpush2.msra.mxu0 0.0
    %698 = vmatprep.subr.mxu0 0.0
    %699 = vmatpush2.msra.mxu0 0.0
    %700 = vmatprep.subr.mxu0 0.0
    %701 = vmatpush2.msra.mxu0 0.0
    %702 = vmatprep.subr.mxu0 0.0
    %703 = vmatpush2.msra.mxu0 0.0
    %704 = vmatprep.subr.mxu0 0.0
    %705 = vmatpush2.msra.mxu0 0.0
    %706 = vmatprep.subr.mxu0 0.0
    %707 = vmatpush2.msra.mxu0 0.0
    %708 = vmatprep.mubr.f32.mxu0 0.0
    %709 = vmatmul.mubr.f32.gmra.mxu0 %v642
    %v710 = vpop.f32.mrf.mxu0
    %v711 = vadd.f32 0.0, %v710
    %v712 = vpop.f32.mrf.mxu0
    %v713 = vadd.f32 0.0, %v712
    %714 = vdwg.mxu0
    %v715 = vadd.f32 %v636, %v711
    %v716 = vadd.f32 %v637, %v713
    %v717 = vxor.u32 %v715, 2147483648
    %v718 = vmul.f32 %v717, 1.442695
    %v719 = vpow.pop %v718
    %v720 = vadd.f32 %v719, 1.0
    %v721 = vrcp.pop %v720
    %v722 = vmul.f32 1.0, %v721
    %v723 = vtanh.pop %v716
    %v724 = vxor.u32 %v716, 2147483648
    %v725 = vmul.f32 %v724, 1.442695
    %v726 = vpow.pop %v725
    %v727 = vadd.f32 %v726, 1.0
    %v728 = vrcp.pop %v727
    %v729 = vmul.f32 1.0, %v728
    %v731 = vrot.slane %v627, 6
    %v733 = vmul.f32 %v722, %v731
    %v734 = vmul.f32 %v722, %v723
    %736 = vrot.lane.b32.xlu0 %v734, 64
    %v737 = vpop.permute.xlu0 %736
    %v739 = vadd.f32 %v733, %v737
    %v740 = vtanh.pop %v739
    %v741 = vmul.f32 %v729, %v740
    %v742 = vrot.slane %v133, 2
    %v743 = vrot.slane %v135, 2
    %v746 = vsel %vm186, %v139, %v742
    %v747 = vsel %vm187, %v141, %v743
    %749 = vrot.lane.b32.xlu0 %v741, 64
    %v750 = vpop.permute.xlu0 %749
    %v751 = vsel %vm196, %v750, 0
    %753 = vmatprep.subr.mxu0 0.0
    %754 = vmatpush1.msra.mxu0 0.0
    %755 = vmatprep.subr.mxu0 0.0
    %756 = vmatpush1.msra.mxu0 0.0
    %757 = vmatprep.subr.mxu0 0.0
    %758 = vmatpush1.msra.mxu0 0.0
    %759 = vmatprep.subr.mxu0 0.0
    %760 = vmatpush1.msra.mxu0 0.0
    %761 = vmatprep.subr.mxu0 0.0
    %762 = vmatpush1.msra.mxu0 0.0
    %763 = vmatprep.subr.mxu0 0.0
    %764 = vmatpush1.msra.mxu0 0.0
    %765 = vmatprep.subr.mxu0 0.0
    %766 = vmatpush1.msra.mxu0 0.0
    %767 = vmatprep.subr.mxu0 0.0
    %768 = vmatpush1.msra.mxu0 0.0
    %769 = vmatprep.subr.mxu0 %v158
    %770 = vmatpush1.msra.mxu0 %v157
    %771 = vmatprep.subr.mxu0 %v156
    %772 = vmatpush1.msra.mxu0 %v155
    %773 = vmatprep.subr.mxu0 %v154
    %774 = vmatpush1.msra.mxu0 %v153
    %775 = vmatprep.subr.mxu0 %v152
    %776 = vmatpush1.msra.mxu0 %v151
    %777 = vmatprep.subr.mxu0 %v150
    %778 = vmatpush1.msra.mxu0 %v149
    %779 = vmatprep.subr.mxu0 %v148
    %780 = vmatpush1.msra.mxu0 %v147
    %781 = vmatprep.subr.mxu0 %v146
    %782 = vmatpush1.msra.mxu0 %v145
    %783 = vmatprep.subr.mxu0 %v144
    %784 = vmatpush1.msra.mxu0 %v143
    %785 = vmatprep.subr.mxu0 0.0
    %786 = vmatpush2.msra.mxu0 0.0
    %787 = vmatprep.subr.mxu0 0.0
    %788 = vmatpush2.msra.mxu0 0.0
    %789 = vmatprep.subr.mxu0 0.0
    %790 = vmatpush2.msra.mxu0 0.0
    %791 = vmatprep.subr.mxu0 0.0
    %792 = vmatpush2.msra.mxu0 0.0
    %793 = vmatprep.subr.mxu0 0.0
    %794 = vmatpush2.msra.mxu0 0.0
    %795 = vmatprep.subr.mxu0 0.0
    %796 = vmatpush2.msra.mxu0 0.0
    %797 = vmatprep.subr.mxu0 0.0
    %798 = vmatpush2.msra.mxu0 0.0
    %799 = vmatprep.subr.mxu0 0.0
    %800 = vmatpush2.msra.mxu0 0.0
    %801 = vmatprep.subr.mxu0 0.0
    %802 = vmatpush2.msra.mxu0 0.0
    %803 = vmatprep.subr.mxu0 0.0
    %804 = vmatpush2.msra.mxu0 0.0
    %805 = vmatprep.subr.mxu0 0.0
    %806 = vmatpush2.msra.mxu0 0.0
    %807 = vmatprep.subr.mxu0 0.0
    %808 = vmatpush2.msra.mxu0 0.0
    %809 = vmatprep.subr.mxu0 0.0
    %810 = vmatpush2.msra.mxu0 0.0
    %811 = vmatprep.subr.mxu0 0.0
    %812 = vmatpush2.msra.mxu0 0.0
    %813 = vmatprep.subr.mxu0 0.0
    %814 = vmatpush2.msra.mxu0 0.0
    %815 = vmatprep.subr.mxu0 0.0
    %816 = vmatpush2.msra.mxu0 0.0
    %817 = vmatprep.mubr.f32.mxu0 0.0
    %818 = vmatmul.mubr.f32.gmra.mxu0 %v751
    %v819 = vpop.f32.mrf.mxu0
    %v820 = vadd.f32 0.0, %v819
    %v821 = vpop.f32.mrf.mxu0
    %v822 = vadd.f32 0.0, %v821
    %823 = vdwg.mxu0
    %v826 = vrot.slane %v820, 6
    %v827 = vrot.slane %v822, 6
    %v830 = vadd.f32 %v746, %v826
    %v831 = vadd.f32 %v747, %v827
    %v832 = vxor.u32 %v830, 2147483648
    %v833 = vmul.f32 %v832, 1.442695
    %v834 = vpow.pop %v833
    %v835 = vadd.f32 %v834, 1.0
    %v836 = vrcp.pop %v835
    %v837 = vmul.f32 1.0, %v836
    %v838 = vtanh.pop %v831
    %v839 = vxor.u32 %v831, 2147483648
    %v840 = vmul.f32 %v839, 1.442695
    %v841 = vpow.pop %v840
    %v842 = vadd.f32 %v841, 1.0
    %v843 = vrcp.pop %v842
    %v844 = vmul.f32 1.0, %v843
    %v846 = vrot.slane %v739, 6
    %v848 = vmul.f32 %v837, %v846
    %v849 = vmul.f32 %v837, %v838
    %851 = vrot.lane.b32.xlu0 %v849, 64
    %v852 = vpop.permute.xlu0 %851
    %v854 = vadd.f32 %v848, %v852
    %v855 = vtanh.pop %v854
    %v856 = vmul.f32 %v844, %v855
    %v858 = vrot.slane %v856, 2
    %859 = vrot.lane.b32.xlu0 %v858, 64
    %v860 = vpop.permute.xlu0 %859
    %v861 = vsel %vm196, %v860, 0
    %863 = vmatprep.subr.mxu0 0.0
    %864 = vmatpush1.msra.mxu0 0.0
    %865 = vmatprep.subr.mxu0 0.0
    %866 = vmatpush1.msra.mxu0 0.0
    %867 = vmatprep.subr.mxu0 0.0
    %868 = vmatpush1.msra.mxu0 0.0
    %869 = vmatprep.subr.mxu0 0.0
    %870 = vmatpush1.msra.mxu0 0.0
    %871 = vmatprep.subr.mxu0 0.0
    %872 = vmatpush1.msra.mxu0 0.0
    %873 = vmatprep.subr.mxu0 0.0
    %874 = vmatpush1.msra.mxu0 0.0
    %875 = vmatprep.subr.mxu0 0.0
    %876 = vmatpush1.msra.mxu0 0.0
    %877 = vmatprep.subr.mxu0 0.0
    %878 = vmatpush1.msra.mxu0 0.0
    %879 = vmatprep.subr.mxu0 %v158
    %880 = vmatpush1.msra.mxu0 %v157
    %881 = vmatprep.subr.mxu0 %v156
    %882 = vmatpush1.msra.mxu0 %v155
    %883 = vmatprep.subr.mxu0 %v154
    %884 = vmatpush1.msra.mxu0 %v153
    %885 = vmatprep.subr.mxu0 %v152
    %886 = vmatpush1.msra.mxu0 %v151
    %887 = vmatprep.subr.mxu0 %v150
    %888 = vmatpush1.msra.mxu0 %v149
    %889 = vmatprep.subr.mxu0 %v148
    %890 = vmatpush1.msra.mxu0 %v147
    %891 = vmatprep.subr.mxu0 %v146
    %892 = vmatpush1.msra.mxu0 %v145
    %893 = vmatprep.subr.mxu0 %v144
    %894 = vmatpush1.msra.mxu0 %v143
    %895 = vmatprep.subr.mxu0 0.0
    %896 = vmatpush2.msra.mxu0 0.0
    %897 = vmatprep.subr.mxu0 0.0
    %898 = vmatpush2.msra.mxu0 0.0
    %899 = vmatprep.subr.mxu0 0.0
    %900 = vmatpush2.msra.mxu0 0.0
    %901 = vmatprep.subr.mxu0 0.0
    %902 = vmatpush2.msra.mxu0 0.0
    %903 = vmatprep.subr.mxu0 0.0
    %904 = vmatpush2.msra.mxu0 0.0
    %905 = vmatprep.subr.mxu0 0.0
    %906 = vmatpush2.msra.mxu0 0.0
    %907 = vmatprep.subr.mxu0 0.0
    %908 = vmatpush2.msra.mxu0 0.0
    %909 = vmatprep.subr.mxu0 0.0
    %910 = vmatpush2.msra.mxu0 0.0
    %911 = vmatprep.subr.mxu0 0.0
    %912 = vmatpush2.msra.mxu0 0.0
    %913 = vmatprep.subr.mxu0 0.0
    %914 = vmatpush2.msra.mxu0 0.0
    %915 = vmatprep.subr.mxu0 0.0
    %916 = vmatpush2.msra.mxu0 0.0
    %917 = vmatprep.subr.mxu0 0.0
    %918 = vmatpush2.msra.mxu0 0.0
    %919 = vmatprep.subr.mxu0 0.0
    %920 = vmatpush2.msra.mxu0 0.0
    %921 = vmatprep.subr.mxu0 0.0
    %922 = vmatpush2.msra.mxu0 0.0
    %923 = vmatprep.subr.mxu0 0.0
    %924 = vmatpush2.msra.mxu0 0.0
    %925 = vmatprep.subr.mxu0 0.0
    %926 = vmatpush2.msra.mxu0 0.0
    %927 = vmatprep.mubr.f32.mxu0 0.0
    %928 = vmatmul.mubr.f32.gmra.mxu0 %v861
    %v929 = vpop.f32.mrf.mxu0
    %v930 = vadd.f32 0.0, %v929
    %v931 = vpop.f32.mrf.mxu0
    %v932 = vadd.f32 0.0, %v931
    %933 = vdwg.mxu0
    %v936 = vrot.slane %v930, 4
    %v937 = vrot.slane %v932, 4
    %v940 = vadd.f32 %v636, %v936
    %v941 = vadd.f32 %v637, %v937
    %v942 = vxor.u32 %v940, 2147483648
    %v943 = vmul.f32 %v942, 1.442695
    %v944 = vpow.pop %v943
    %v945 = vadd.f32 %v944, 1.0
    %v946 = vrcp.pop %v945
    %v947 = vmul.f32 1.0, %v946
    %v948 = vtanh.pop %v941
    %v949 = vxor.u32 %v941, 2147483648
    %v950 = vmul.f32 %v949, 1.442695
    %v951 = vpow.pop %v950
    %v952 = vadd.f32 %v951, 1.0
    %v953 = vrcp.pop %v952
    %v954 = vmul.f32 1.0, %v953
    %v956 = vrot.slane %v854, 6
    %v958 = vmul.f32 %v947, %v956
    %v959 = vmul.f32 %v947, %v948
    %961 = vrot.lane.b32.xlu0 %v959, 64
    %v962 = vpop.permute.xlu0 %961
    %v964 = vadd.f32 %v958, %v962
    %v965 = vtanh.pop %v964
    %v966 = vmul.f32 %v954, %v965
    %v968 = vrot.slane %v966, 4
    %969 = vrot.lane.b32.xlu0 %v968, 64
    %v970 = vpop.permute.xlu0 %969
    %v971 = vsel %vm196, %v970, 0
    %973 = vmatprep.subr.mxu0 0.0
    %974 = vmatpush1.msra.mxu0 0.0
    %975 = vmatprep.subr.mxu0 0.0
    %976 = vmatpush1.msra.mxu0 0.0
    %977 = vmatprep.subr.mxu0 0.0
    %978 = vmatpush1.msra.mxu0 0.0
    %979 = vmatprep.subr.mxu0 0.0
    %980 = vmatpush1.msra.mxu0 0.0
    %981 = vmatprep.subr.mxu0 0.0
    %982 = vmatpush1.msra.mxu0 0.0
    %983 = vmatprep.subr.mxu0 0.0
    %984 = vmatpush1.msra.mxu0 0.0
    %985 = vmatprep.subr.mxu0 0.0
    %986 = vmatpush1.msra.mxu0 0.0
    %987 = vmatprep.subr.mxu0 0.0
    %988 = vmatpush1.msra.mxu0 0.0
    %989 = vmatprep.subr.mxu0 %v158
    %990 = vmatpush1.msra.mxu0 %v157
    %991 = vmatprep.subr.mxu0 %v156
    %992 = vmatpush1.msra.mxu0 %v155
    %993 = vmatprep.subr.mxu0 %v154
    %994 = vmatpush1.msra.mxu0 %v153
    %995 = vmatprep.subr.mxu0 %v152
    %996 = vmatpush1.msra.mxu0 %v151
    %997 = vmatprep.subr.mxu0 %v150
    %998 = vmatpush1.msra.mxu0 %v149
    %999 = vmatprep.subr.mxu0 %v148
    %1000 = vmatpush1.msra.mxu0 %v147
    %1001 = vmatprep.subr.mxu0 %v146
    %1002 = vmatpush1.msra.mxu0 %v145
    %1003 = vmatprep.subr.mxu0 %v144
    %1004 = vmatpush1.msra.mxu0 %v143
    %1005 = vmatprep.subr.mxu0 0.0
    %1006 = vmatpush2.msra.mxu0 0.0
    %1007 = vmatprep.subr.mxu0 0.0
    %1008 = vmatpush2.msra.mxu0 0.0
    %1009 = vmatprep.subr.mxu0 0.0
    %1010 = vmatpush2.msra.mxu0 0.0
    %1011 = vmatprep.subr.mxu0 0.0
    %1012 = vmatpush2.msra.mxu0 0.0
    %1013 = vmatprep.subr.mxu0 0.0
    %1014 = vmatpush2.msra.mxu0 0.0
    %1015 = vmatprep.subr.mxu0 0.0
    %1016 = vmatpush2.msra.mxu0 0.0
    %1017 = vmatprep.subr.mxu0 0.0
    %1018 = vmatpush2.msra.mxu0 0.0
    %1019 = vmatprep.subr.mxu0 0.0
    %1020 = vmatpush2.msra.mxu0 0.0
    %1021 = vmatprep.subr.mxu0 0.0
    %1022 = vmatpush2.msra.mxu0 0.0
    %1023 = vmatprep.subr.mxu0 0.0
    %1024 = vmatpush2.msra.mxu0 0.0
    %1025 = vmatprep.subr.mxu0 0.0
    %1026 = vmatpush2.msra.mxu0 0.0
    %1027 = vmatprep.subr.mxu0 0.0
    %1028 = vmatpush2.msra.mxu0 0.0
    %1029 = vmatprep.subr.mxu0 0.0
    %1030 = vmatpush2.msra.mxu0 0.0
    %1031 = vmatprep.subr.mxu0 0.0
    %1032 = vmatpush2.msra.mxu0 0.0
    %1033 = vmatprep.subr.mxu0 0.0
    %1034 = vmatpush2.msra.mxu0 0.0
    %1035 = vmatprep.subr.mxu0 0.0
    %1036 = vmatpush2.msra.mxu0 0.0
    %1037 = vmatprep.mubr.f32.mxu0 0.0
    %1038 = vmatmul.mubr.f32.gmra.mxu0 %v971
    %v1039 = vpop.f32.mrf.mxu0
    %v1040 = vadd.f32 0.0, %v1039
    %v1041 = vpop.f32.mrf.mxu0
    %v1042 = vadd.f32 0.0, %v1041
    %1043 = vdwg.mxu0
    %v1046 = vrot.slane %v1040, 2
    %v1047 = vrot.slane %v1042, 2
    %v1050 = vadd.f32 %v746, %v1046
    %v1051 = vadd.f32 %v747, %v1047
    %v1052 = vxor.u32 %v1050, 2147483648
    %v1053 = vmul.f32 %v1052, 1.442695
    %v1054 = vpow.pop %v1053
    %v1055 = vadd.f32 %v1054, 1.0
    %v1056 = vrcp.pop %v1055
    %v1057 = vmul.f32 1.0, %v1056
    %v1058 = vtanh.pop %v1051
    %v1059 = vxor.u32 %v1051, 2147483648
    %v1060 = vmul.f32 %v1059, 1.442695
    %v1061 = vpow.pop %v1060
    %v1062 = vadd.f32 %v1061, 1.0
    %v1063 = vrcp.pop %v1062
    %v1064 = vmul.f32 1.0, %v1063
    %v1066 = vrot.slane %v964, 6
    %v1068 = vmul.f32 %v1057, %v1066
    %v1069 = vmul.f32 %v1057, %v1058
    %1071 = vrot.lane.b32.xlu0 %v1069, 64
    %v1072 = vpop.permute.xlu0 %1071
    %v1074 = vadd.f32 %v1068, %v1072
    %v1075 = vtanh.pop %v1074
    %v1076 = vmul.f32 %v1064, %v1075
    %v1077 = vmax.f32 %v1076, 0.0
    %v1078 = vld [vmem:[#allocation5 + $0xb0] sm:$0xff]
    %v1079 = vld [vmem:[#allocation5 + $0xc0] sm:$0xff]
    %v1080 = vld [vmem:[#allocation5 + $0xd0] sm:$0xff]
    %v1081 = vld [vmem:[#allocation5 + $0xe0] sm:$0xff]
    %v1082 = vld [vmem:[#allocation5 + $0xf0] sm:$0xff]
    %v1083 = vld [vmem:[#allocation5 + $0x100] sm:$0xff]
    %v1084 = vld [vmem:[#allocation5 + $0x110] sm:$0xff]
    %v1085 = vld [vmem:[#allocation5 + $0x120] sm:$0xff]
    %v1086 = vld [vmem:[#allocation5 + $0x130] ss:$0 sm:$0xff]
    %v1088 = vrot.slane %v1077, 6
    %1089 = vrot.lane.b32.xlu0 %v1088, 64
    %v1090 = vpop.permute.xlu0 %1089
    %v1091 = vsel %vm196, %v1090, 0
    %1093 = vmatprep.subr.mxu0 0.0
    %1094 = vmatpush1.msra.mxu0 0.0
    %1095 = vmatprep.subr.mxu0 0.0
    %1096 = vmatpush1.msra.mxu0 0.0
    %1097 = vmatprep.subr.mxu0 0.0
    %1098 = vmatpush1.msra.mxu0 0.0
    %1099 = vmatprep.subr.mxu0 0.0
    %1100 = vmatpush1.msra.mxu0 0.0
    %1101 = vmatprep.subr.mxu0 0.0
    %1102 = vmatpush1.msra.mxu0 0.0
    %1103 = vmatprep.subr.mxu0 0.0
    %1104 = vmatpush1.msra.mxu0 0.0
    %1105 = vmatprep.subr.mxu0 0.0
    %1106 = vmatpush1.msra.mxu0 0.0
    %1107 = vmatprep.subr.mxu0 0.0
    %1108 = vmatpush1.msra.mxu0 0.0
    %1109 = vmatprep.subr.mxu0 0.0
    %1110 = vmatpush1.msra.mxu0 %v1085
    %1111 = vmatprep.subr.mxu0 0.0
    %1112 = vmatpush1.msra.mxu0 %v1084
    %1113 = vmatprep.subr.mxu0 0.0
    %1114 = vmatpush1.msra.mxu0 %v1083
    %1115 = vmatprep.subr.mxu0 0.0
    %1116 = vmatpush1.msra.mxu0 %v1082
    %1117 = vmatprep.subr.mxu0 0.0
    %1118 = vmatpush1.msra.mxu0 %v1081
    %1119 = vmatprep.subr.mxu0 0.0
    %1120 = vmatpush1.msra.mxu0 %v1080
    %1121 = vmatprep.subr.mxu0 0.0
    %1122 = vmatpush1.msra.mxu0 %v1079
    %1123 = vmatprep.subr.mxu0 0.0
    %1124 = vmatpush1.msra.mxu0 %v1078
    %1125 = vmatprep.subr.mxu0 0.0
    %1126 = vmatpush2.msra.mxu0 0.0
    %1127 = vmatprep.subr.mxu0 0.0
    %1128 = vmatpush2.msra.mxu0 0.0
    %1129 = vmatprep.subr.mxu0 0.0
    %1130 = vmatpush2.msra.mxu0 0.0
    %1131 = vmatprep.subr.mxu0 0.0
    %1132 = vmatpush2.msra.mxu0 0.0
    %1133 = vmatprep.subr.mxu0 0.0
    %1134 = vmatpush2.msra.mxu0 0.0
    %1135 = vmatprep.subr.mxu0 0.0
    %1136 = vmatpush2.msra.mxu0 0.0
    %1137 = vmatprep.subr.mxu0 0.0
    %1138 = vmatpush2.msra.mxu0 0.0
    %1139 = vmatprep.subr.mxu0 0.0
    %1140 = vmatpush2.msra.mxu0 0.0
    %1141 = vmatprep.subr.mxu0 0.0
    %1142 = vmatpush2.msra.mxu0 0.0
    %1143 = vmatprep.subr.mxu0 0.0
    %1144 = vmatpush2.msra.mxu0 0.0
    %1145 = vmatprep.subr.mxu0 0.0
    %1146 = vmatpush2.msra.mxu0 0.0
    %1147 = vmatprep.subr.mxu0 0.0
    %1148 = vmatpush2.msra.mxu0 0.0
    %1149 = vmatprep.subr.mxu0 0.0
    %1150 = vmatpush2.msra.mxu0 0.0
    %1151 = vmatprep.subr.mxu0 0.0
    %1152 = vmatpush2.msra.mxu0 0.0
    %1153 = vmatprep.subr.mxu0 0.0
    %1154 = vmatpush2.msra.mxu0 0.0
    %1155 = vmatprep.subr.mxu0 0.0
    %1156 = vmatpush2.msra.mxu0 0.0
    %1157 = vmatprep.mubr.f32.mxu0 0.0
    %1158 = vmatmul.mubr.f32.gmra.mxu0 %v1091
    %v1159 = vpop.f32.mrf.mxu0
    %v1160 = vadd.f32 %v1086, %v1159
    %v1161 = vpop.f32.mrf.mxu0
    %1162 = vdwg.mxu0
    %v1163 = vld [vmem:[#allocation5 + $0x140] sm:$0xff]
    %v1164 = vld [vmem:[#allocation5 + $0x150] sm:$0xff]
    %v1165 = vld [vmem:[#allocation5 + $0x160] sm:$0xff]
    %v1166 = vld [vmem:[#allocation5 + $0x170] sm:$0xff]
    %v1167 = vld [vmem:[#allocation5 + $0x180] ss:$0 sm:$0xff]
    %vm1168 = vcmask 261120
    %v1170 = vsel %vm1168, %v1160, 0
    %1172 = vmatprep.subr.mxu0 0.0
    %1173 = vmatpush1.msra.mxu0 0.0
    %1174 = vmatprep.subr.mxu0 0.0
    %1175 = vmatpush1.msra.mxu0 0.0
    %1176 = vmatprep.subr.mxu0 0.0
    %1177 = vmatpush1.msra.mxu0 0.0
    %1178 = vmatprep.subr.mxu0 0.0
    %1179 = vmatpush1.msra.mxu0 0.0
    %1180 = vmatprep.subr.mxu0 0.0
    %1181 = vmatpush1.msra.mxu0 0.0
    %1182 = vmatprep.subr.mxu0 0.0
    %1183 = vmatpush1.msra.mxu0 0.0
    %1184 = vmatprep.subr.mxu0 0.0
    %1185 = vmatpush1.msra.mxu0 0.0
    %1186 = vmatprep.subr.mxu0 0.0
    %1187 = vmatpush1.msra.mxu0 0.0
    %1188 = vmatprep.subr.mxu0 0.0
    %1189 = vmatpush1.msra.mxu0 0.0
    %1190 = vmatprep.subr.mxu0 0.0
    %1191 = vmatpush1.msra.mxu0 0.0
    %1192 = vmatprep.subr.mxu0 0.0
    %1193 = vmatpush1.msra.mxu0 0.0
    %1194 = vmatprep.subr.mxu0 0.0
    %1195 = vmatpush1.msra.mxu0 0.0
    %1196 = vmatprep.subr.mxu0 0.0
    %1197 = vmatpush1.msra.mxu0 %v1166
    %1198 = vmatprep.subr.mxu0 0.0
    %1199 = vmatpush1.msra.mxu0 %v1165
    %1200 = vmatprep.subr.mxu0 0.0
    %1201 = vmatpush1.msra.mxu0 %v1164
    %1202 = vmatprep.subr.mxu0 0.0
    %1203 = vmatpush1.msra.mxu0 %v1163
    %1204 = vmatprep.subr.mxu0 0.0
    %1205 = vmatpush2.msra.mxu0 0.0
    %1206 = vmatprep.subr.mxu0 0.0
    %1207 = vmatpush2.msra.mxu0 0.0
    %1208 = vmatprep.subr.mxu0 0.0
    %1209 = vmatpush2.msra.mxu0 0.0
    %1210 = vmatprep.subr.mxu0 0.0
    %1211 = vmatpush2.msra.mxu0 0.0
    %1212 = vmatprep.subr.mxu0 0.0
    %1213 = vmatpush2.msra.mxu0 0.0
    %1214 = vmatprep.subr.mxu0 0.0
    %1215 = vmatpush2.msra.mxu0 0.0
    %1216 = vmatprep.subr.mxu0 0.0
    %1217 = vmatpush2.msra.mxu0 0.0
    %1218 = vmatprep.subr.mxu0 0.0
    %1219 = vmatpush2.msra.mxu0 0.0
    %1220 = vmatprep.subr.mxu0 0.0
    %1221 = vmatpush2.msra.mxu0 0.0
    %1222 = vmatprep.subr.mxu0 0.0
    %1223 = vmatpush2.msra.mxu0 0.0
    %1224 = vmatprep.subr.mxu0 0.0
    %1225 = vmatpush2.msra.mxu0 0.0
    %1226 = vmatprep.subr.mxu0 0.0
    %1227 = vmatpush2.msra.mxu0 0.0
    %1228 = vmatprep.subr.mxu0 0.0
    %1229 = vmatpush2.msra.mxu0 0.0
    %1230 = vmatprep.subr.mxu0 0.0
    %1231 = vmatpush2.msra.mxu0 0.0
    %1232 = vmatprep.subr.mxu0 0.0
    %1233 = vmatpush2.msra.mxu0 0.0
    %1234 = vmatprep.subr.mxu0 0.0
    %1235 = vmatpush2.msra.mxu0 0.0
    %1236 = vmatprep.mubr.f32.mxu0 0.0
    %1237 = vmatmul.mubr.f32.gmra.mxu0 %v1170
    %v1238 = vpop.f32.mrf.mxu0
    %v1239 = vadd.f32 %v1167, %v1238
    %v1240 = vpop.f32.mrf.mxu0
    %1241 = vdwg.mxu0
    %vm1242 = vcmask 25600
    %1243 = vst.msk [vmem:[#allocation7] sm:$0x3] %vm1242, %v1239
    // Predicated region
    $region18: #{tpu_custom_call.1} parent=1 // pred_check
      _
    $region19: #{tpu_custom_call.1} parent=1 // pred_check_branch
      %1245 = sbr.rel (0) target = $region21
    $region20: #{tpu_custom_call.1} parent=1 // pred_region
      %s1247 = ssub.s32 32, 32
      %1248 = vsyncadd [#allocation4], %s1247
      %s1250 = sshll.u32 [#allocation7], 4
      %s1251 = int_to_ptr.vmem [resolvable:$true] %s1250
      %1253 = dma.vmem_to_hbm [thread:$0]  %s1251, 32, %s2, [#allocation4]
    $region21: #{tpu_custom_call.1} parent=1 // pred_fallthru
      _
    // Predicated region
    $region22: #{tpu_custom_call.1} parent=1 // pred_check
      _
    $region23: #{tpu_custom_call.1} parent=1 // pred_check_branch
      %1255 = sbr.rel (0) target = $region25
    $region24: #{tpu_custom_call.1} parent=1 // pred_region
      %1256 = dma.done [#allocation4], 32
    $region25: #{tpu_custom_call.1} parent=1 // pred_fallthru
      _
    %1257 = vsyncpa [#allocation3], 1
    %1258 = vsyncpa [#allocation6], 1
    %1259 = vsyncpa [#allocation4], 1

</llo_original>
